<compile_context>
chip_gen: v7x
topology: tpu7x:2x2x1
jax: 0.10.0
libtpu: 0.0.40
codegen_flags: <defaults>
</compile_context>

<pallas_src>
import jax
import jax.numpy as jnp
from jax.experimental import pallas as pl
from jax.experimental.pallas import tpu as pltpu

DIM = 128  # module default
B = 8      # small batch (multiple of 8 sublanes)


def m2_kernel(idx_ref,                # SMEM (B,)      int32
              x_ref,                  # VMEM (B, DIM)  f32
              w1_ref, b1_ref,         # VMEM (DIM,DIM) bf16, (1,DIM) f32
              w2_ref, b2_ref,         # VMEM (DIM,DIM) bf16, (1,DIM) f32
              other1_in, other2_in,   # ANY/HBM (DIM,DIM) f32  (donation carriers)
              h2_ref,                 # VMEM (B, DIM)  f32   (final output)
              other1_hbm, other2_hbm, # ANY/HBM (DIM,DIM) f32 (aliased to inputs 6/7)
              h1_vmem,                # VMEM scratch (B, DIM) f32
              dma_sem):               # DMA semaphores (2,)
    del other1_in, other2_in  # same HBM buffers as other{1,2}_hbm (aliased)

    x = x_ref[...]
    b1 = b1_ref[...]
    b2 = b2_ref[...]

    # block 1: h1 = x + (x @ W1.T + b1) -- contraction on dim 1 of both operands,
    # so no transpose op is needed anywhere; bf16 inputs, f32 MXU accumulate.
    lin1 = jax.lax.dot_general(
        x.astype(jnp.bfloat16), w1_ref[...],
        dimension_numbers=(((1,), (1,)), ((), ())),
        preferred_element_type=jnp.float32)
    h1 = x + lin1 + b1
    h1_vmem[...] = h1

    # block 2: h2 = h1 + (h1 @ W2.T + b2)
    lin2 = jax.lax.dot_general(
        h1.astype(jnp.bfloat16), w2_ref[...],
        dimension_numbers=(((1,), (1,)), ((), ())),
        preferred_element_type=jnp.float32)
    h2_ref[...] = h1 + lin2 + b2

    # Fused in-place scatter: other1[idx[i]] = h1[i]; other2[idx[i]] = h2[i].
    # Per-row DMAs into the aliased HBM buffers; sequential per row so duplicate
    # indices are last-write-wins (matches PyTorch in-place semantics).
    n_rows = x_ref.shape[0]
    for i in range(n_rows):
        r = idx_ref[i]
        cp1 = pltpu.make_async_copy(h1_vmem.at[pl.ds(i, 1)],
                                    other1_hbm.at[pl.ds(r, 1)],
                                    dma_sem.at[0])
        cp2 = pltpu.make_async_copy(h2_ref.at[pl.ds(i, 1)],
                                    other2_hbm.at[pl.ds(r, 1)],
                                    dma_sem.at[1])
        cp1.start()
        cp2.start()
        cp1.wait()
        cp2.wait()


def m2_forward(x, idx, params, buffers):
    """Runs M2.forward. Returns (h2, new_buffers); buffers are updated in place
    via aliased (donated) pallas outputs."""
    w1, b1, w2, b2 = params          # w: (DIM, DIM) bf16 (untransposed), b: (1, DIM) f32
    other1, other2 = buffers         # (DIM, DIM) f32
    bsz, d = x.shape

    smem = pl.BlockSpec(memory_space=pltpu.MemorySpace.SMEM)
    vmem = pl.BlockSpec(memory_space=pltpu.MemorySpace.VMEM)
    hbm = pl.BlockSpec(memory_space=pl.ANY)

    h2, new_other1, new_other2 = pl.pallas_call(
        m2_kernel,
        out_shape=(
            jax.ShapeDtypeStruct((bsz, d), jnp.float32),   # h2
            jax.ShapeDtypeStruct((d, d), jnp.float32),     # other1 (aliased)
            jax.ShapeDtypeStruct((d, d), jnp.float32),     # other2 (aliased)
        ),
        in_specs=[
            smem,   # idx
            vmem,   # x
            vmem,   # w1
            vmem,   # b1
            vmem,   # w2
            vmem,   # b2
            hbm,    # other1 (HBM, donated)
            hbm,    # other2 (HBM, donated)
        ],
        out_specs=(vmem, hbm, hbm),
        scratch_shapes=[
            pltpu.VMEM((bsz, d), jnp.float32),   # h1 staging for the row DMAs
            pltpu.SemaphoreType.DMA((2,)),
        ],
        input_output_aliases={6: 1, 7: 2},
        cost_estimate=pl.CostEstimate(
            flops=2 * 2 * bsz * d * d,
            transcendentals=0,
            bytes_accessed=2 * d * d * 2          # bf16 weights
            + 3 * bsz * d * 4                     # x in, h2 out, h1 rows scattered
            + bsz * d * 4                         # h2 rows scattered
            + 2 * d * 4,                          # biases
        ),
    )(idx.astype(jnp.int32), x, w1, b1, w2, b2, other1, other2)

    return h2, (new_other1, new_other2)


def _reference_bf16(x, idx, params, buffers):
    """Same math as the kernel (bf16 matmul inputs, f32 accumulate)."""
    w1, b1, w2, b2 = params
    def block(h, w, b):
        lin = jax.lax.dot_general(
            h.astype(jnp.bfloat16), w,
            dimension_numbers=(((1,), (1,)), ((), ())),
            preferred_element_type=jnp.float32)
        return h + lin + b
    h1 = block(x, w1, b1)
    h2 = block(h1, w2, b2)
    o1, o2 = buffers
    return h2, (o1.at[idx].set(h1), o2.at[idx].set(h2))


def _reference_f32(x, idx, params, buffers):
    """Original PyTorch-module semantics in full f32."""
    w1, b1, w2, b2 = params
    w1 = w1.astype(jnp.float32)
    w2 = w2.astype(jnp.float32)
    h1 = x + (x @ w1.T + b1)
    h2 = h1 + (h1 @ w2.T + b2)
    o1, o2 = buffers
    return h2, (o1.at[idx].set(h1), o2.at[idx].set(h2))


if __name__ == "__main__":
    key = jax.random.PRNGKey(0)
    kx, kw1, kb1, kw2, kb2, kidx = jax.random.split(key, 6)

    bound = 1.0 / jnp.sqrt(DIM)
    # torch.nn.Linear-style uniform init; weights stored bf16 (fed straight to the MXU)
    w1 = jax.random.uniform(kw1, (DIM, DIM), jnp.float32, -bound, bound).astype(jnp.bfloat16)
    b1 = jax.random.uniform(kb1, (1, DIM), jnp.float32, -bound, bound)
    w2 = jax.random.uniform(kw2, (DIM, DIM), jnp.float32, -bound, bound).astype(jnp.bfloat16)
    b2 = jax.random.uniform(kb2, (1, DIM), jnp.float32, -bound, bound)
    params = (w1, b1, w2, b2)

    x = jax.random.normal(kx, (B, DIM), jnp.float32)
    # unique row indices (duplicate-index ordering is implementation-defined in JAX scatter)
    idx = jax.random.permutation(kidx, DIM)[:B].astype(jnp.int32)

    # registered buffers: torch.zeros(DIM, DIM). Donated to the jitted call so the
    # fused scatter writes them in place with no full-buffer copies.
    buffers = (jnp.zeros((DIM, DIM), jnp.float32), jnp.zeros((DIM, DIM), jnp.float32))

    fwd = jax.jit(m2_forward, donate_argnums=(3,))
    out, new_buffers = fwd(x, idx, params, buffers)
    jax.block_until_ready((out, new_buffers))

    # fresh reference buffers (the originals were donated)
    ref_buffers = (jnp.zeros((DIM, DIM), jnp.float32), jnp.zeros((DIM, DIM), jnp.float32))

    # Tight check against the bf16-matmul reference (same arithmetic as the kernel).
    ref_out, ref_bufs = _reference_bf16(x, idx, params, ref_buffers)
    assert jnp.allclose(out, ref_out, atol=1e-4, rtol=1e-4)
    assert jnp.allclose(new_buffers[0], ref_bufs[0], atol=1e-4, rtol=1e-4)
    assert jnp.allclose(new_buffers[1], ref_bufs[1], atol=1e-4, rtol=1e-4)

    # Looser check against the original f32 module semantics (bf16 matmul error bound).
    ref32_out, ref32_bufs = _reference_f32(x, idx, params, ref_buffers)
    assert jnp.allclose(out, ref32_out, atol=2e-2, rtol=2e-2)
    assert jnp.allclose(new_buffers[0], ref32_bufs[0], atol=2e-2, rtol=2e-2)
    assert jnp.allclose(new_buffers[1], ref32_bufs[1], atol=2e-2, rtol=2e-2)

    print("KERNEL_OK")
</pallas_src>

<mosaic_0001>
module attributes {stable_mosaic.version = 11 : i64} {
  func.func @m2_kernel(%arg0: memref<8xi32, #tpu.memory_space<smem>>, %arg1: memref<8x128xf32, #tpu.memory_space<vmem>>, %arg2: memref<128x128xbf16, #tpu.memory_space<vmem>>, %arg3: memref<1x128xf32, #tpu.memory_space<vmem>>, %arg4: memref<128x128xbf16, #tpu.memory_space<vmem>>, %arg5: memref<1x128xf32, #tpu.memory_space<vmem>>, %arg6: memref<128x128xf32, #tpu.memory_space<any>>, %arg7: memref<128x128xf32, #tpu.memory_space<any>>, %arg8: memref<8x128xf32, #tpu.memory_space<vmem>>, %arg9: memref<128x128xf32, #tpu.memory_space<any>>, %arg10: memref<128x128xf32, #tpu.memory_space<any>>, %arg11: memref<8x128xf32, #tpu.memory_space<vmem>>, %arg12: memref<2x!tpu.dma_semaphore, #tpu.memory_space<semaphore_mem>>) attributes {dimension_semantics = [], scalar_prefetch = 0 : i64, scratch_operands = 2 : i64, tpu.core_type = #tpu.core_type<tc>} {
    %c0 = arith.constant 0 : index
    %c0_0 = arith.constant 0 : index
    %0 = vector.load %arg1[%c0, %c0_0] : memref<8x128xf32, #tpu.memory_space<vmem>>, vector<8x128xf32>
    %c0_1 = arith.constant 0 : index
    %c0_2 = arith.constant 0 : index
    %1 = vector.load %arg3[%c0_1, %c0_2] : memref<1x128xf32, #tpu.memory_space<vmem>>, vector<1x128xf32>
    %c0_3 = arith.constant 0 : index
    %c0_4 = arith.constant 0 : index
    %2 = vector.load %arg5[%c0_3, %c0_4] : memref<1x128xf32, #tpu.memory_space<vmem>>, vector<1x128xf32>
    %3 = arith.truncf %0 : vector<8x128xf32> to vector<8x128xbf16>
    %c0_5 = arith.constant 0 : index
    %c0_6 = arith.constant 0 : index
    %4 = vector.load %arg2[%c0_5, %c0_6] : memref<128x128xbf16, #tpu.memory_space<vmem>>, vector<128x128xbf16>
    %cst = arith.constant dense<0.000000e+00> : vector<8x128xf32>
    %5 = tpu.matmul %3, %4, %cst {dimension_numbers = #tpu.dot_dimension_numbers<[1], [1], [0], [0], [0, 0, 1, 0], [], []>} : vector<8x128xbf16>, vector<128x128xbf16>, vector<8x128xf32> -> vector<8x128xf32>
    %6 = arith.addf %0, %5 : vector<8x128xf32>
    %7 = vector.broadcast %1 : vector<1x128xf32> to vector<8x128xf32>
    %8 = arith.addf %6, %7 : vector<8x128xf32>
    %c0_7 = arith.constant 0 : index
    %c0_8 = arith.constant 0 : index
    %9 = vector.load %arg11[%c0_7, %c0_8] : memref<8x128xf32, #tpu.memory_space<vmem>>, vector<8x128xf32>
    tpu.vector_store %arg11[%c0_7, %c0_8], %8 {strides = array<i32>} : memref<8x128xf32, #tpu.memory_space<vmem>>, vector<8x128xf32>,
    %10 = arith.truncf %8 : vector<8x128xf32> to vector<8x128xbf16>
    %c0_9 = arith.constant 0 : index
    %c0_10 = arith.constant 0 : index
    %11 = vector.load %arg4[%c0_9, %c0_10] : memref<128x128xbf16, #tpu.memory_space<vmem>>, vector<128x128xbf16>
    %cst_11 = arith.constant dense<0.000000e+00> : vector<8x128xf32>
    %12 = tpu.matmul %10, %11, %cst_11 {dimension_numbers = #tpu.dot_dimension_numbers<[1], [1], [0], [0], [0, 0, 1, 0], [], []>} : vector<8x128xbf16>, vector<128x128xbf16>, vector<8x128xf32> -> vector<8x128xf32>
    %13 = arith.addf %8, %12 : vector<8x128xf32>
    %14 = vector.broadcast %2 : vector<1x128xf32> to vector<8x128xf32>
    %15 = arith.addf %13, %14 : vector<8x128xf32>
    %c0_12 = arith.constant 0 : index
    %c0_13 = arith.constant 0 : index
    %16 = vector.load %arg8[%c0_12, %c0_13] : memref<8x128xf32, #tpu.memory_space<vmem>>, vector<8x128xf32>
    tpu.vector_store %arg8[%c0_12, %c0_13], %15 {strides = array<i32>} : memref<8x128xf32, #tpu.memory_space<vmem>>, vector<8x128xf32>,
    %c0_14 = arith.constant 0 : index
    %17 = memref.load %arg0[%c0_14] : memref<8xi32, #tpu.memory_space<smem>>
    %c0_i32 = arith.constant 0 : i32
    %c0_i32_15 = arith.constant 0 : i32
    %c0_i32_16 = arith.constant 0 : i32
    %18 = tpu.memref_slice %arg11[%c0_i32_15, %c0_i32_16] : memref<8x128xf32, #tpu.memory_space<vmem>> -> memref<1x128xf32, #tpu.memory_space<vmem>>
    %c0_i32_17 = arith.constant 0 : i32
    %19 = tpu.memref_slice %arg9[%17, %c0_i32_17] : memref<128x128xf32, #tpu.memory_space<any>> -> memref<1x128xf32, #tpu.memory_space<any>>
    %20 = tpu.memref_slice %arg12[%c0_i32] : memref<2x!tpu.dma_semaphore, #tpu.memory_space<semaphore_mem>> -> memref<1x!tpu.dma_semaphore, #tpu.memory_space<semaphore_mem>>
    %21 = tpu.memref_squeeze %20 : memref<1x!tpu.dma_semaphore, #tpu.memory_space<semaphore_mem>> -> memref<!tpu.dma_semaphore, #tpu.memory_space<semaphore_mem>>
    tpu.enqueue_dma source(%18 : memref<1x128xf32, #tpu.memory_space<vmem>>) target(%19 : memref<1x128xf32, #tpu.memory_space<any>>) target_semaphore(%21 : memref<!tpu.dma_semaphore, #tpu.memory_space<semaphore_mem>>)
    %c1_i32 = arith.constant 1 : i32
    %c0_i32_18 = arith.constant 0 : i32
    %c0_i32_19 = arith.constant 0 : i32
    %22 = tpu.memref_slice %arg8[%c0_i32_18, %c0_i32_19] : memref<8x128xf32, #tpu.memory_space<vmem>> -> memref<1x128xf32, #tpu.memory_space<vmem>>
    %c0_i32_20 = arith.constant 0 : i32
    %23 = tpu.memref_slice %arg10[%17, %c0_i32_20] : memref<128x128xf32, #tpu.memory_space<any>> -> memref<1x128xf32, #tpu.memory_space<any>>
    %24 = tpu.memref_slice %arg12[%c1_i32] : memref<2x!tpu.dma_semaphore, #tpu.memory_space<semaphore_mem>> -> memref<1x!tpu.dma_semaphore, #tpu.memory_space<semaphore_mem>>
    %25 = tpu.memref_squeeze %24 : memref<1x!tpu.dma_semaphore, #tpu.memory_space<semaphore_mem>> -> memref<!tpu.dma_semaphore, #tpu.memory_space<semaphore_mem>>
    tpu.enqueue_dma source(%22 : memref<1x128xf32, #tpu.memory_space<vmem>>) target(%23 : memref<1x128xf32, #tpu.memory_space<any>>) target_semaphore(%25 : memref<!tpu.dma_semaphore, #tpu.memory_space<semaphore_mem>>)
    %c0_i32_21 = arith.constant 0 : i32
    %c0_i32_22 = arith.constant 0 : i32
    %c0_i32_23 = arith.constant 0 : i32
    %26 = tpu.memref_slice %arg11[%c0_i32_22, %c0_i32_23] : memref<8x128xf32, #tpu.memory_space<vmem>> -> memref<1x128xf32, #tpu.memory_space<vmem>>
    %c0_i32_24 = arith.constant 0 : i32
    %27 = tpu.memref_slice %arg9[%17, %c0_i32_24] : memref<128x128xf32, #tpu.memory_space<any>> -> memref<1x128xf32, #tpu.memory_space<any>>
    %28 = tpu.memref_slice %arg12[%c0_i32_21] : memref<2x!tpu.dma_semaphore, #tpu.memory_space<semaphore_mem>> -> memref<1x!tpu.dma_semaphore, #tpu.memory_space<semaphore_mem>>
    %29 = tpu.memref_squeeze %28 : memref<1x!tpu.dma_semaphore, #tpu.memory_space<semaphore_mem>> -> memref<!tpu.dma_semaphore, #tpu.memory_space<semaphore_mem>>
    tpu.wait_dma2 semaphore(%29 : memref<!tpu.dma_semaphore, #tpu.memory_space<semaphore_mem>>) src(%26 : memref<1x128xf32, #tpu.memory_space<vmem>>) dst(%27 : memref<1x128xf32, #tpu.memory_space<any>>)
    %c1_i32_25 = arith.constant 1 : i32
    %c0_i32_26 = arith.constant 0 : i32
    %c0_i32_27 = arith.constant 0 : i32
    %30 = tpu.memref_slice %arg8[%c0_i32_26, %c0_i32_27] : memref<8x128xf32, #tpu.memory_space<vmem>> -> memref<1x128xf32, #tpu.memory_space<vmem>>
    %c0_i32_28 = arith.constant 0 : i32
    %31 = tpu.memref_slice %arg10[%17, %c0_i32_28] : memref<128x128xf32, #tpu.memory_space<any>> -> memref<1x128xf32, #tpu.memory_space<any>>
    %32 = tpu.memref_slice %arg12[%c1_i32_25] : memref<2x!tpu.dma_semaphore, #tpu.memory_space<semaphore_mem>> -> memref<1x!tpu.dma_semaphore, #tpu.memory_space<semaphore_mem>>
    %33 = tpu.memref_squeeze %32 : memref<1x!tpu.dma_semaphore, #tpu.memory_space<semaphore_mem>> -> memref<!tpu.dma_semaphore, #tpu.memory_space<semaphore_mem>>
    tpu.wait_dma2 semaphore(%33 : memref<!tpu.dma_semaphore, #tpu.memory_space<semaphore_mem>>) src(%30 : memref<1x128xf32, #tpu.memory_space<vmem>>) dst(%31 : memref<1x128xf32, #tpu.memory_space<any>>)
    %c1 = arith.constant 1 : index
    %34 = memref.load %arg0[%c1] : memref<8xi32, #tpu.memory_space<smem>>
    %c0_i32_29 = arith.constant 0 : i32
    %c1_i32_30 = arith.constant 1 : i32
    %c0_i32_31 = arith.constant 0 : i32
    %35 = tpu.memref_slice %arg11[%c1_i32_30, %c0_i32_31] : memref<8x128xf32, #tpu.memory_space<vmem>> -> memref<1x128xf32, #tpu.memory_space<vmem>>
    %c0_i32_32 = arith.constant 0 : i32
    %36 = tpu.memref_slice %arg9[%34, %c0_i32_32] : memref<128x128xf32, #tpu.memory_space<any>> -> memref<1x128xf32, #tpu.memory_space<any>>
    %37 = tpu.memref_slice %arg12[%c0_i32_29] : memref<2x!tpu.dma_semaphore, #tpu.memory_space<semaphore_mem>> -> memref<1x!tpu.dma_semaphore, #tpu.memory_space<semaphore_mem>>
    %38 = tpu.memref_squeeze %37 : memref<1x!tpu.dma_semaphore, #tpu.memory_space<semaphore_mem>> -> memref<!tpu.dma_semaphore, #tpu.memory_space<semaphore_mem>>
    tpu.enqueue_dma source(%35 : memref<1x128xf32, #tpu.memory_space<vmem>>) target(%36 : memref<1x128xf32, #tpu.memory_space<any>>) target_semaphore(%38 : memref<!tpu.dma_semaphore, #tpu.memory_space<semaphore_mem>>)
    %c1_i32_33 = arith.constant 1 : i32
    %c1_i32_34 = arith.constant 1 : i32
    %c0_i32_35 = arith.constant 0 : i32
    %39 = tpu.memref_slice %arg8[%c1_i32_34, %c0_i32_35] : memref<8x128xf32, #tpu.memory_space<vmem>> -> memref<1x128xf32, #tpu.memory_space<vmem>>
    %c0_i32_36 = arith.constant 0 : i32
    %40 = tpu.memref_slice %arg10[%34, %c0_i32_36] : memref<128x128xf32, #tpu.memory_space<any>> -> memref<1x128xf32, #tpu.memory_space<any>>
    %41 = tpu.memref_slice %arg12[%c1_i32_33] : memref<2x!tpu.dma_semaphore, #tpu.memory_space<semaphore_mem>> -> memref<1x!tpu.dma_semaphore, #tpu.memory_space<semaphore_mem>>
    %42 = tpu.memref_squeeze %41 : memref<1x!tpu.dma_semaphore, #tpu.memory_space<semaphore_mem>> -> memref<!tpu.dma_semaphore, #tpu.memory_space<semaphore_mem>>
    tpu.enqueue_dma source(%39 : memref<1x128xf32, #tpu.memory_space<vmem>>) target(%40 : memref<1x128xf32, #tpu.memory_space<any>>) target_semaphore(%42 : memref<!tpu.dma_semaphore, #tpu.memory_space<semaphore_mem>>)
    %c0_i32_37 = arith.constant 0 : i32
    %c1_i32_38 = arith.constant 1 : i32
    %c0_i32_39 = arith.constant 0 : i32
    %43 = tpu.memref_slice %arg11[%c1_i32_38, %c0_i32_39] : memref<8x128xf32, #tpu.memory_space<vmem>> -> memref<1x128xf32, #tpu.memory_space<vmem>>
    %c0_i32_40 = arith.constant 0 : i32
    %44 = tpu.memref_slice %arg9[%34, %c0_i32_40] : memref<128x128xf32, #tpu.memory_space<any>> -> memref<1x128xf32, #tpu.memory_space<any>>
    %45 = tpu.memref_slice %arg12[%c0_i32_37] : memref<2x!tpu.dma_semaphore, #tpu.memory_space<semaphore_mem>> -> memref<1x!tpu.dma_semaphore, #tpu.memory_space<semaphore_mem>>
    %46 = tpu.memref_squeeze %45 : memref<1x!tpu.dma_semaphore, #tpu.memory_space<semaphore_mem>> -> memref<!tpu.dma_semaphore, #tpu.memory_space<semaphore_mem>>
    tpu.wait_dma2 semaphore(%46 : memref<!tpu.dma_semaphore, #tpu.memory_space<semaphore_mem>>) src(%43 : memref<1x128xf32, #tpu.memory_space<vmem>>) dst(%44 : memref<1x128xf32, #tpu.memory_space<any>>)
    %c1_i32_41 = arith.constant 1 : i32
    %c1_i32_42 = arith.constant 1 : i32
    %c0_i32_43 = arith.constant 0 : i32
    %47 = tpu.memref_slice %arg8[%c1_i32_42, %c0_i32_43] : memref<8x128xf32, #tpu.memory_space<vmem>> -> memref<1x128xf32, #tpu.memory_space<vmem>>
    %c0_i32_44 = arith.constant 0 : i32
    %48 = tpu.memref_slice %arg10[%34, %c0_i32_44] : memref<128x128xf32, #tpu.memory_space<any>> -> memref<1x128xf32, #tpu.memory_space<any>>
    %49 = tpu.memref_slice %arg12[%c1_i32_41] : memref<2x!tpu.dma_semaphore, #tpu.memory_space<semaphore_mem>> -> memref<1x!tpu.dma_semaphore, #tpu.memory_space<semaphore_mem>>
    %50 = tpu.memref_squeeze %49 : memref<1x!tpu.dma_semaphore, #tpu.memory_space<semaphore_mem>> -> memref<!tpu.dma_semaphore, #tpu.memory_space<semaphore_mem>>
    tpu.wait_dma2 semaphore(%50 : memref<!tpu.dma_semaphore, #tpu.memory_space<semaphore_mem>>) src(%47 : memref<1x128xf32, #tpu.memory_space<vmem>>) dst(%48 : memref<1x128xf32, #tpu.memory_space<any>>)
    %c2 = arith.constant 2 : index
    %51 = memref.load %arg0[%c2] : memref<8xi32, #tpu.memory_space<smem>>
    %c0_i32_45 = arith.constant 0 : i32
    %c2_i32 = arith.constant 2 : i32
    %c0_i32_46 = arith.constant 0 : i32
    %52 = tpu.memref_slice %arg11[%c2_i32, %c0_i32_46] : memref<8x128xf32, #tpu.memory_space<vmem>> -> memref<1x128xf32, #tpu.memory_space<vmem>>
    %c0_i32_47 = arith.constant 0 : i32
    %53 = tpu.memref_slice %arg9[%51, %c0_i32_47] : memref<128x128xf32, #tpu.memory_space<any>> -> memref<1x128xf32, #tpu.memory_space<any>>
    %54 = tpu.memref_slice %arg12[%c0_i32_45] : memref<2x!tpu.dma_semaphore, #tpu.memory_space<semaphore_mem>> -> memref<1x!tpu.dma_semaphore, #tpu.memory_space<semaphore_mem>>
    %55 = tpu.memref_squeeze %54 : memref<1x!tpu.dma_semaphore, #tpu.memory_space<semaphore_mem>> -> memref<!tpu.dma_semaphore, #tpu.memory_space<semaphore_mem>>
    tpu.enqueue_dma source(%52 : memref<1x128xf32, #tpu.memory_space<vmem>>) target(%53 : memref<1x128xf32, #tpu.memory_space<any>>) target_semaphore(%55 : memref<!tpu.dma_semaphore, #tpu.memory_space<semaphore_mem>>)
    %c1_i32_48 = arith.constant 1 : i32
    %c2_i32_49 = arith.constant 2 : i32
    %c0_i32_50 = arith.constant 0 : i32
    %56 = tpu.memref_slice %arg8[%c2_i32_49, %c0_i32_50] : memref<8x128xf32, #tpu.memory_space<vmem>> -> memref<1x128xf32, #tpu.memory_space<vmem>>
    %c0_i32_51 = arith.constant 0 : i32
    %57 = tpu.memref_slice %arg10[%51, %c0_i32_51] : memref<128x128xf32, #tpu.memory_space<any>> -> memref<1x128xf32, #tpu.memory_space<any>>
    %58 = tpu.memref_slice %arg12[%c1_i32_48] : memref<2x!tpu.dma_semaphore, #tpu.memory_space<semaphore_mem>> -> memref<1x!tpu.dma_semaphore, #tpu.memory_space<semaphore_mem>>
    %59 = tpu.memref_squeeze %58 : memref<1x!tpu.dma_semaphore, #tpu.memory_space<semaphore_mem>> -> memref<!tpu.dma_semaphore, #tpu.memory_space<semaphore_mem>>
    tpu.enqueue_dma source(%56 : memref<1x128xf32, #tpu.memory_space<vmem>>) target(%57 : memref<1x128xf32, #tpu.memory_space<any>>) target_semaphore(%59 : memref<!tpu.dma_semaphore, #tpu.memory_space<semaphore_mem>>)
    %c0_i32_52 = arith.constant 0 : i32
    %c2_i32_53 = arith.constant 2 : i32
    %c0_i32_54 = arith.constant 0 : i32
    %60 = tpu.memref_slice %arg11[%c2_i32_53, %c0_i32_54] : memref<8x128xf32, #tpu.memory_space<vmem>> -> memref<1x128xf32, #tpu.memory_space<vmem>>
    %c0_i32_55 = arith.constant 0 : i32
    %61 = tpu.memref_slice %arg9[%51, %c0_i32_55] : memref<128x128xf32, #tpu.memory_space<any>> -> memref<1x128xf32, #tpu.memory_space<any>>
    %62 = tpu.memref_slice %arg12[%c0_i32_52] : memref<2x!tpu.dma_semaphore, #tpu.memory_space<semaphore_mem>> -> memref<1x!tpu.dma_semaphore, #tpu.memory_space<semaphore_mem>>
    %63 = tpu.memref_squeeze %62 : memref<1x!tpu.dma_semaphore, #tpu.memory_space<semaphore_mem>> -> memref<!tpu.dma_semaphore, #tpu.memory_space<semaphore_mem>>
    tpu.wait_dma2 semaphore(%63 : memref<!tpu.dma_semaphore, #tpu.memory_space<semaphore_mem>>) src(%60 : memref<1x128xf32, #tpu.memory_space<vmem>>) dst(%61 : memref<1x128xf32, #tpu.memory_space<any>>)
    %c1_i32_56 = arith.constant 1 : i32
    %c2_i32_57 = arith.constant 2 : i32
    %c0_i32_58 = arith.constant 0 : i32
    %64 = tpu.memref_slice %arg8[%c2_i32_57, %c0_i32_58] : memref<8x128xf32, #tpu.memory_space<vmem>> -> memref<1x128xf32, #tpu.memory_space<vmem>>
    %c0_i32_59 = arith.constant 0 : i32
    %65 = tpu.memref_slice %arg10[%51, %c0_i32_59] : memref<128x128xf32, #tpu.memory_space<any>> -> memref<1x128xf32, #tpu.memory_space<any>>
    %66 = tpu.memref_slice %arg12[%c1_i32_56] : memref<2x!tpu.dma_semaphore, #tpu.memory_space<semaphore_mem>> -> memref<1x!tpu.dma_semaphore, #tpu.memory_space<semaphore_mem>>
    %67 = tpu.memref_squeeze %66 : memref<1x!tpu.dma_semaphore, #tpu.memory_space<semaphore_mem>> -> memref<!tpu.dma_semaphore, #tpu.memory_space<semaphore_mem>>
    tpu.wait_dma2 semaphore(%67 : memref<!tpu.dma_semaphore, #tpu.memory_space<semaphore_mem>>) src(%64 : memref<1x128xf32, #tpu.memory_space<vmem>>) dst(%65 : memref<1x128xf32, #tpu.memory_space<any>>)
    %c3 = arith.constant 3 : index
    %68 = memref.load %arg0[%c3] : memref<8xi32, #tpu.memory_space<smem>>
    %c0_i32_60 = arith.constant 0 : i32
    %c3_i32 = arith.constant 3 : i32
    %c0_i32_61 = arith.constant 0 : i32
    %69 = tpu.memref_slice %arg11[%c3_i32, %c0_i32_61] : memref<8x128xf32, #tpu.memory_space<vmem>> -> memref<1x128xf32, #tpu.memory_space<vmem>>
    %c0_i32_62 = arith.constant 0 : i32
    %70 = tpu.memref_slice %arg9[%68, %c0_i32_62] : memref<128x128xf32, #tpu.memory_space<any>> -> memref<1x128xf32, #tpu.memory_space<any>>
    %71 = tpu.memref_slice %arg12[%c0_i32_60] : memref<2x!tpu.dma_semaphore, #tpu.memory_space<semaphore_mem>> -> memref<1x!tpu.dma_semaphore, #tpu.memory_space<semaphore_mem>>
    %72 = tpu.memref_squeeze %71 : memref<1x!tpu.dma_semaphore, #tpu.memory_space<semaphore_mem>> -> memref<!tpu.dma_semaphore, #tpu.memory_space<semaphore_mem>>
    tpu.enqueue_dma source(%69 : memref<1x128xf32, #tpu.memory_space<vmem>>) target(%70 : memref<1x128xf32, #tpu.memory_space<any>>) target_semaphore(%72 : memref<!tpu.dma_semaphore, #tpu.memory_space<semaphore_mem>>)
    %c1_i32_63 = arith.constant 1 : i32
    %c3_i32_64 = arith.constant 3 : i32
    %c0_i32_65 = arith.constant 0 : i32
    %73 = tpu.memref_slice %arg8[%c3_i32_64, %c0_i32_65] : memref<8x128xf32, #tpu.memory_space<vmem>> -> memref<1x128xf32, #tpu.memory_space<vmem>>
    %c0_i32_66 = arith.constant 0 : i32
    %74 = tpu.memref_slice %arg10[%68, %c0_i32_66] : memref<128x128xf32, #tpu.memory_space<any>> -> memref<1x128xf32, #tpu.memory_space<any>>
    %75 = tpu.memref_slice %arg12[%c1_i32_63] : memref<2x!tpu.dma_semaphore, #tpu.memory_space<semaphore_mem>> -> memref<1x!tpu.dma_semaphore, #tpu.memory_space<semaphore_mem>>
    %76 = tpu.memref_squeeze %75 : memref<1x!tpu.dma_semaphore, #tpu.memory_space<semaphore_mem>> -> memref<!tpu.dma_semaphore, #tpu.memory_space<semaphore_mem>>
    tpu.enqueue_dma source(%73 : memref<1x128xf32, #tpu.memory_space<vmem>>) target(%74 : memref<1x128xf32, #tpu.memory_space<any>>) target_semaphore(%76 : memref<!tpu.dma_semaphore, #tpu.memory_space<semaphore_mem>>)
    %c0_i32_67 = arith.constant 0 : i32
    %c3_i32_68 = arith.constant 3 : i32
    %c0_i32_69 = arith.constant 0 : i32
    %77 = tpu.memref_slice %arg11[%c3_i32_68, %c0_i32_69] : memref<8x128xf32, #tpu.memory_space<vmem>> -> memref<1x128xf32, #tpu.memory_space<vmem>>
    %c0_i32_70 = arith.constant 0 : i32
    %78 = tpu.memref_slice %arg9[%68, %c0_i32_70] : memref<128x128xf32, #tpu.memory_space<any>> -> memref<1x128xf32, #tpu.memory_space<any>>
    %79 = tpu.memref_slice %arg12[%c0_i32_67] : memref<2x!tpu.dma_semaphore, #tpu.memory_space<semaphore_mem>> -> memref<1x!tpu.dma_semaphore, #tpu.memory_space<semaphore_mem>>
    %80 = tpu.memref_squeeze %79 : memref<1x!tpu.dma_semaphore, #tpu.memory_space<semaphore_mem>> -> memref<!tpu.dma_semaphore, #tpu.memory_space<semaphore_mem>>
    tpu.wait_dma2 semaphore(%80 : memref<!tpu.dma_semaphore, #tpu.memory_space<semaphore_mem>>) src(%77 : memref<1x128xf32, #tpu.memory_space<vmem>>) dst(%78 : memref<1x128xf32, #tpu.memory_space<any>>)
    %c1_i32_71 = arith.constant 1 : i32
    %c3_i32_72 = arith.constant 3 : i32
    %c0_i32_73 = arith.constant 0 : i32
    %81 = tpu.memref_slice %arg8[%c3_i32_72, %c0_i32_73] : memref<8x128xf32, #tpu.memory_space<vmem>> -> memref<1x128xf32, #tpu.memory_space<vmem>>
    %c0_i32_74 = arith.constant 0 : i32
    %82 = tpu.memref_slice %arg10[%68, %c0_i32_74] : memref<128x128xf32, #tpu.memory_space<any>> -> memref<1x128xf32, #tpu.memory_space<any>>
    %83 = tpu.memref_slice %arg12[%c1_i32_71] : memref<2x!tpu.dma_semaphore, #tpu.memory_space<semaphore_mem>> -> memref<1x!tpu.dma_semaphore, #tpu.memory_space<semaphore_mem>>
    %84 = tpu.memref_squeeze %83 : memref<1x!tpu.dma_semaphore, #tpu.memory_space<semaphore_mem>> -> memref<!tpu.dma_semaphore, #tpu.memory_space<semaphore_mem>>
    tpu.wait_dma2 semaphore(%84 : memref<!tpu.dma_semaphore, #tpu.memory_space<semaphore_mem>>) src(%81 : memref<1x128xf32, #tpu.memory_space<vmem>>) dst(%82 : memref<1x128xf32, #tpu.memory_space<any>>)
    %c4 = arith.constant 4 : index
    %85 = memref.load %arg0[%c4] : memref<8xi32, #tpu.memory_space<smem>>
    %c0_i32_75 = arith.constant 0 : i32
    %c4_i32 = arith.constant 4 : i32
    %c0_i32_76 = arith.constant 0 : i32
    %86 = tpu.memref_slice %arg11[%c4_i32, %c0_i32_76] : memref<8x128xf32, #tpu.memory_space<vmem>> -> memref<1x128xf32, #tpu.memory_space<vmem>>
    %c0_i32_77 = arith.constant 0 : i32
    %87 = tpu.memref_slice %arg9[%85, %c0_i32_77] : memref<128x128xf32, #tpu.memory_space<any>> -> memref<1x128xf32, #tpu.memory_space<any>>
    %88 = tpu.memref_slice %arg12[%c0_i32_75] : memref<2x!tpu.dma_semaphore, #tpu.memory_space<semaphore_mem>> -> memref<1x!tpu.dma_semaphore, #tpu.memory_space<semaphore_mem>>
    %89 = tpu.memref_squeeze %88 : memref<1x!tpu.dma_semaphore, #tpu.memory_space<semaphore_mem>> -> memref<!tpu.dma_semaphore, #tpu.memory_space<semaphore_mem>>
    tpu.enqueue_dma source(%86 : memref<1x128xf32, #tpu.memory_space<vmem>>) target(%87 : memref<1x128xf32, #tpu.memory_space<any>>) target_semaphore(%89 : memref<!tpu.dma_semaphore, #tpu.memory_space<semaphore_mem>>)
    %c1_i32_78 = arith.constant 1 : i32
    %c4_i32_79 = arith.constant 4 : i32
    %c0_i32_80 = arith.constant 0 : i32
    %90 = tpu.memref_slice %arg8[%c4_i32_79, %c0_i32_80] : memref<8x128xf32, #tpu.memory_space<vmem>> -> memref<1x128xf32, #tpu.memory_space<vmem>>
    %c0_i32_81 = arith.constant 0 : i32
    %91 = tpu.memref_slice %arg10[%85, %c0_i32_81] : memref<128x128xf32, #tpu.memory_space<any>> -> memref<1x128xf32, #tpu.memory_space<any>>
    %92 = tpu.memref_slice %arg12[%c1_i32_78] : memref<2x!tpu.dma_semaphore, #tpu.memory_space<semaphore_mem>> -> memref<1x!tpu.dma_semaphore, #tpu.memory_space<semaphore_mem>>
    %93 = tpu.memref_squeeze %92 : memref<1x!tpu.dma_semaphore, #tpu.memory_space<semaphore_mem>> -> memref<!tpu.dma_semaphore, #tpu.memory_space<semaphore_mem>>
    tpu.enqueue_dma source(%90 : memref<1x128xf32, #tpu.memory_space<vmem>>) target(%91 : memref<1x128xf32, #tpu.memory_space<any>>) target_semaphore(%93 : memref<!tpu.dma_semaphore, #tpu.memory_space<semaphore_mem>>)
    %c0_i32_82 = arith.constant 0 : i32
    %c4_i32_83 = arith.constant 4 : i32
    %c0_i32_84 = arith.constant 0 : i32
    %94 = tpu.memref_slice %arg11[%c4_i32_83, %c0_i32_84] : memref<8x128xf32, #tpu.memory_space<vmem>> -> memref<1x128xf32, #tpu.memory_space<vmem>>
    %c0_i32_85 = arith.constant 0 : i32
    %95 = tpu.memref_slice %arg9[%85, %c0_i32_85] : memref<128x128xf32, #tpu.memory_space<any>> -> memref<1x128xf32, #tpu.memory_space<any>>
    %96 = tpu.memref_slice %arg12[%c0_i32_82] : memref<2x!tpu.dma_semaphore, #tpu.memory_space<semaphore_mem>> -> memref<1x!tpu.dma_semaphore, #tpu.memory_space<semaphore_mem>>
    %97 = tpu.memref_squeeze %96 : memref<1x!tpu.dma_semaphore, #tpu.memory_space<semaphore_mem>> -> memref<!tpu.dma_semaphore, #tpu.memory_space<semaphore_mem>>
    tpu.wait_dma2 semaphore(%97 : memref<!tpu.dma_semaphore, #tpu.memory_space<semaphore_mem>>) src(%94 : memref<1x128xf32, #tpu.memory_space<vmem>>) dst(%95 : memref<1x128xf32, #tpu.memory_space<any>>)
    %c1_i32_86 = arith.constant 1 : i32
    %c4_i32_87 = arith.constant 4 : i32
    %c0_i32_88 = arith.constant 0 : i32
    %98 = tpu.memref_slice %arg8[%c4_i32_87, %c0_i32_88] : memref<8x128xf32, #tpu.memory_space<vmem>> -> memref<1x128xf32, #tpu.memory_space<vmem>>
    %c0_i32_89 = arith.constant 0 : i32
    %99 = tpu.memref_slice %arg10[%85, %c0_i32_89] : memref<128x128xf32, #tpu.memory_space<any>> -> memref<1x128xf32, #tpu.memory_space<any>>
    %100 = tpu.memref_slice %arg12[%c1_i32_86] : memref<2x!tpu.dma_semaphore, #tpu.memory_space<semaphore_mem>> -> memref<1x!tpu.dma_semaphore, #tpu.memory_space<semaphore_mem>>
    %101 = tpu.memref_squeeze %100 : memref<1x!tpu.dma_semaphore, #tpu.memory_space<semaphore_mem>> -> memref<!tpu.dma_semaphore, #tpu.memory_space<semaphore_mem>>
    tpu.wait_dma2 semaphore(%101 : memref<!tpu.dma_semaphore, #tpu.memory_space<semaphore_mem>>) src(%98 : memref<1x128xf32, #tpu.memory_space<vmem>>) dst(%99 : memref<1x128xf32, #tpu.memory_space<any>>)
    %c5 = arith.constant 5 : index
    %102 = memref.load %arg0[%c5] : memref<8xi32, #tpu.memory_space<smem>>
    %c0_i32_90 = arith.constant 0 : i32
    %c5_i32 = arith.constant 5 : i32
    %c0_i32_91 = arith.constant 0 : i32
    %103 = tpu.memref_slice %arg11[%c5_i32, %c0_i32_91] : memref<8x128xf32, #tpu.memory_space<vmem>> -> memref<1x128xf32, #tpu.memory_space<vmem>>
    %c0_i32_92 = arith.constant 0 : i32
    %104 = tpu.memref_slice %arg9[%102, %c0_i32_92] : memref<128x128xf32, #tpu.memory_space<any>> -> memref<1x128xf32, #tpu.memory_space<any>>
    %105 = tpu.memref_slice %arg12[%c0_i32_90] : memref<2x!tpu.dma_semaphore, #tpu.memory_space<semaphore_mem>> -> memref<1x!tpu.dma_semaphore, #tpu.memory_space<semaphore_mem>>
    %106 = tpu.memref_squeeze %105 : memref<1x!tpu.dma_semaphore, #tpu.memory_space<semaphore_mem>> -> memref<!tpu.dma_semaphore, #tpu.memory_space<semaphore_mem>>
    tpu.enqueue_dma source(%103 : memref<1x128xf32, #tpu.memory_space<vmem>>) target(%104 : memref<1x128xf32, #tpu.memory_space<any>>) target_semaphore(%106 : memref<!tpu.dma_semaphore, #tpu.memory_space<semaphore_mem>>)
    %c1_i32_93 = arith.constant 1 : i32
    %c5_i32_94 = arith.constant 5 : i32
    %c0_i32_95 = arith.constant 0 : i32
    %107 = tpu.memref_slice %arg8[%c5_i32_94, %c0_i32_95] : memref<8x128xf32, #tpu.memory_space<vmem>> -> memref<1x128xf32, #tpu.memory_space<vmem>>
    %c0_i32_96 = arith.constant 0 : i32
    %108 = tpu.memref_slice %arg10[%102, %c0_i32_96] : memref<128x128xf32, #tpu.memory_space<any>> -> memref<1x128xf32, #tpu.memory_space<any>>
    %109 = tpu.memref_slice %arg12[%c1_i32_93] : memref<2x!tpu.dma_semaphore, #tpu.memory_space<semaphore_mem>> -> memref<1x!tpu.dma_semaphore, #tpu.memory_space<semaphore_mem>>
    %110 = tpu.memref_squeeze %109 : memref<1x!tpu.dma_semaphore, #tpu.memory_space<semaphore_mem>> -> memref<!tpu.dma_semaphore, #tpu.memory_space<semaphore_mem>>
    tpu.enqueue_dma source(%107 : memref<1x128xf32, #tpu.memory_space<vmem>>) target(%108 : memref<1x128xf32, #tpu.memory_space<any>>) target_semaphore(%110 : memref<!tpu.dma_semaphore, #tpu.memory_space<semaphore_mem>>)
    %c0_i32_97 = arith.constant 0 : i32
    %c5_i32_98 = arith.constant 5 : i32
    %c0_i32_99 = arith.constant 0 : i32
    %111 = tpu.memref_slice %arg11[%c5_i32_98, %c0_i32_99] : memref<8x128xf32, #tpu.memory_space<vmem>> -> memref<1x128xf32, #tpu.memory_space<vmem>>
    %c0_i32_100 = arith.constant 0 : i32
    %112 = tpu.memref_slice %arg9[%102, %c0_i32_100] : memref<128x128xf32, #tpu.memory_space<any>> -> memref<1x128xf32, #tpu.memory_space<any>>
    %113 = tpu.memref_slice %arg12[%c0_i32_97] : memref<2x!tpu.dma_semaphore, #tpu.memory_space<semaphore_mem>> -> memref<1x!tpu.dma_semaphore, #tpu.memory_space<semaphore_mem>>
    %114 = tpu.memref_squeeze %113 : memref<1x!tpu.dma_semaphore, #tpu.memory_space<semaphore_mem>> -> memref<!tpu.dma_semaphore, #tpu.memory_space<semaphore_mem>>
    tpu.wait_dma2 semaphore(%114 : memref<!tpu.dma_semaphore, #tpu.memory_space<semaphore_mem>>) src(%111 : memref<1x128xf32, #tpu.memory_space<vmem>>) dst(%112 : memref<1x128xf32, #tpu.memory_space<any>>)
    %c1_i32_101 = arith.constant 1 : i32
    %c5_i32_102 = arith.constant 5 : i32
    %c0_i32_103 = arith.constant 0 : i32
    %115 = tpu.memref_slice %arg8[%c5_i32_102, %c0_i32_103] : memref<8x128xf32, #tpu.memory_space<vmem>> -> memref<1x128xf32, #tpu.memory_space<vmem>>
    %c0_i32_104 = arith.constant 0 : i32
    %116 = tpu.memref_slice %arg10[%102, %c0_i32_104] : memref<128x128xf32, #tpu.memory_space<any>> -> memref<1x128xf32, #tpu.memory_space<any>>
    %117 = tpu.memref_slice %arg12[%c1_i32_101] : memref<2x!tpu.dma_semaphore, #tpu.memory_space<semaphore_mem>> -> memref<1x!tpu.dma_semaphore, #tpu.memory_space<semaphore_mem>>
    %118 = tpu.memref_squeeze %117 : memref<1x!tpu.dma_semaphore, #tpu.memory_space<semaphore_mem>> -> memref<!tpu.dma_semaphore, #tpu.memory_space<semaphore_mem>>
    tpu.wait_dma2 semaphore(%118 : memref<!tpu.dma_semaphore, #tpu.memory_space<semaphore_mem>>) src(%115 : memref<1x128xf32, #tpu.memory_space<vmem>>) dst(%116 : memref<1x128xf32, #tpu.memory_space<any>>)
    %c6 = arith.constant 6 : index
    %119 = memref.load %arg0[%c6] : memref<8xi32, #tpu.memory_space<smem>>
    %c0_i32_105 = arith.constant 0 : i32
    %c6_i32 = arith.constant 6 : i32
    %c0_i32_106 = arith.constant 0 : i32
    %120 = tpu.memref_slice %arg11[%c6_i32, %c0_i32_106] : memref<8x128xf32, #tpu.memory_space<vmem>> -> memref<1x128xf32, #tpu.memory_space<vmem>>
    %c0_i32_107 = arith.constant 0 : i32
    %121 = tpu.memref_slice %arg9[%119, %c0_i32_107] : memref<128x128xf32, #tpu.memory_space<any>> -> memref<1x128xf32, #tpu.memory_space<any>>
    %122 = tpu.memref_slice %arg12[%c0_i32_105] : memref<2x!tpu.dma_semaphore, #tpu.memory_space<semaphore_mem>> -> memref<1x!tpu.dma_semaphore, #tpu.memory_space<semaphore_mem>>
    %123 = tpu.memref_squeeze %122 : memref<1x!tpu.dma_semaphore, #tpu.memory_space<semaphore_mem>> -> memref<!tpu.dma_semaphore, #tpu.memory_space<semaphore_mem>>
    tpu.enqueue_dma source(%120 : memref<1x128xf32, #tpu.memory_space<vmem>>) target(%121 : memref<1x128xf32, #tpu.memory_space<any>>) target_semaphore(%123 : memref<!tpu.dma_semaphore, #tpu.memory_space<semaphore_mem>>)
    %c1_i32_108 = arith.constant 1 : i32
    %c6_i32_109 = arith.constant 6 : i32
    %c0_i32_110 = arith.constant 0 : i32
    %124 = tpu.memref_slice %arg8[%c6_i32_109, %c0_i32_110] : memref<8x128xf32, #tpu.memory_space<vmem>> -> memref<1x128xf32, #tpu.memory_space<vmem>>
    %c0_i32_111 = arith.constant 0 : i32
    %125 = tpu.memref_slice %arg10[%119, %c0_i32_111] : memref<128x128xf32, #tpu.memory_space<any>> -> memref<1x128xf32, #tpu.memory_space<any>>
    %126 = tpu.memref_slice %arg12[%c1_i32_108] : memref<2x!tpu.dma_semaphore, #tpu.memory_space<semaphore_mem>> -> memref<1x!tpu.dma_semaphore, #tpu.memory_space<semaphore_mem>>
    %127 = tpu.memref_squeeze %126 : memref<1x!tpu.dma_semaphore, #tpu.memory_space<semaphore_mem>> -> memref<!tpu.dma_semaphore, #tpu.memory_space<semaphore_mem>>
    tpu.enqueue_dma source(%124 : memref<1x128xf32, #tpu.memory_space<vmem>>) target(%125 : memref<1x128xf32, #tpu.memory_space<any>>) target_semaphore(%127 : memref<!tpu.dma_semaphore, #tpu.memory_space<semaphore_mem>>)
    %c0_i32_112 = arith.constant 0 : i32
    %c6_i32_113 = arith.constant 6 : i32
    %c0_i32_114 = arith.constant 0 : i32
    %128 = tpu.memref_slice %arg11[%c6_i32_113, %c0_i32_114] : memref<8x128xf32, #tpu.memory_space<vmem>> -> memref<1x128xf32, #tpu.memory_space<vmem>>
    %c0_i32_115 = arith.constant 0 : i32
    %129 = tpu.memref_slice %arg9[%119, %c0_i32_115] : memref<128x128xf32, #tpu.memory_space<any>> -> memref<1x128xf32, #tpu.memory_space<any>>
    %130 = tpu.memref_slice %arg12[%c0_i32_112] : memref<2x!tpu.dma_semaphore, #tpu.memory_space<semaphore_mem>> -> memref<1x!tpu.dma_semaphore, #tpu.memory_space<semaphore_mem>>
    %131 = tpu.memref_squeeze %130 : memref<1x!tpu.dma_semaphore, #tpu.memory_space<semaphore_mem>> -> memref<!tpu.dma_semaphore, #tpu.memory_space<semaphore_mem>>
    tpu.wait_dma2 semaphore(%131 : memref<!tpu.dma_semaphore, #tpu.memory_space<semaphore_mem>>) src(%128 : memref<1x128xf32, #tpu.memory_space<vmem>>) dst(%129 : memref<1x128xf32, #tpu.memory_space<any>>)
    %c1_i32_116 = arith.constant 1 : i32
    %c6_i32_117 = arith.constant 6 : i32
    %c0_i32_118 = arith.constant 0 : i32
    %132 = tpu.memref_slice %arg8[%c6_i32_117, %c0_i32_118] : memref<8x128xf32, #tpu.memory_space<vmem>> -> memref<1x128xf32, #tpu.memory_space<vmem>>
    %c0_i32_119 = arith.constant 0 : i32
    %133 = tpu.memref_slice %arg10[%119, %c0_i32_119] : memref<128x128xf32, #tpu.memory_space<any>> -> memref<1x128xf32, #tpu.memory_space<any>>
    %134 = tpu.memref_slice %arg12[%c1_i32_116] : memref<2x!tpu.dma_semaphore, #tpu.memory_space<semaphore_mem>> -> memref<1x!tpu.dma_semaphore, #tpu.memory_space<semaphore_mem>>
    %135 = tpu.memref_squeeze %134 : memref<1x!tpu.dma_semaphore, #tpu.memory_space<semaphore_mem>> -> memref<!tpu.dma_semaphore, #tpu.memory_space<semaphore_mem>>
    tpu.wait_dma2 semaphore(%135 : memref<!tpu.dma_semaphore, #tpu.memory_space<semaphore_mem>>) src(%132 : memref<1x128xf32, #tpu.memory_space<vmem>>) dst(%133 : memref<1x128xf32, #tpu.memory_space<any>>)
    %c7 = arith.constant 7 : index
    %136 = memref.load %arg0[%c7] : memref<8xi32, #tpu.memory_space<smem>>
    %c0_i32_120 = arith.constant 0 : i32
    %c7_i32 = arith.constant 7 : i32
    %c0_i32_121 = arith.constant 0 : i32
    %137 = tpu.memref_slice %arg11[%c7_i32, %c0_i32_121] : memref<8x128xf32, #tpu.memory_space<vmem>> -> memref<1x128xf32, #tpu.memory_space<vmem>>
    %c0_i32_122 = arith.constant 0 : i32
    %138 = tpu.memref_slice %arg9[%136, %c0_i32_122] : memref<128x128xf32, #tpu.memory_space<any>> -> memref<1x128xf32, #tpu.memory_space<any>>
    %139 = tpu.memref_slice %arg12[%c0_i32_120] : memref<2x!tpu.dma_semaphore, #tpu.memory_space<semaphore_mem>> -> memref<1x!tpu.dma_semaphore, #tpu.memory_space<semaphore_mem>>
    %140 = tpu.memref_squeeze %139 : memref<1x!tpu.dma_semaphore, #tpu.memory_space<semaphore_mem>> -> memref<!tpu.dma_semaphore, #tpu.memory_space<semaphore_mem>>
    tpu.enqueue_dma source(%137 : memref<1x128xf32, #tpu.memory_space<vmem>>) target(%138 : memref<1x128xf32, #tpu.memory_space<any>>) target_semaphore(%140 : memref<!tpu.dma_semaphore, #tpu.memory_space<semaphore_mem>>)
    %c1_i32_123 = arith.constant 1 : i32
    %c7_i32_124 = arith.constant 7 : i32
    %c0_i32_125 = arith.constant 0 : i32
    %141 = tpu.memref_slice %arg8[%c7_i32_124, %c0_i32_125] : memref<8x128xf32, #tpu.memory_space<vmem>> -> memref<1x128xf32, #tpu.memory_space<vmem>>
    %c0_i32_126 = arith.constant 0 : i32
    %142 = tpu.memref_slice %arg10[%136, %c0_i32_126] : memref<128x128xf32, #tpu.memory_space<any>> -> memref<1x128xf32, #tpu.memory_space<any>>
    %143 = tpu.memref_slice %arg12[%c1_i32_123] : memref<2x!tpu.dma_semaphore, #tpu.memory_space<semaphore_mem>> -> memref<1x!tpu.dma_semaphore, #tpu.memory_space<semaphore_mem>>
    %144 = tpu.memref_squeeze %143 : memref<1x!tpu.dma_semaphore, #tpu.memory_space<semaphore_mem>> -> memref<!tpu.dma_semaphore, #tpu.memory_space<semaphore_mem>>
    tpu.enqueue_dma source(%141 : memref<1x128xf32, #tpu.memory_space<vmem>>) target(%142 : memref<1x128xf32, #tpu.memory_space<any>>) target_semaphore(%144 : memref<!tpu.dma_semaphore, #tpu.memory_space<semaphore_mem>>)
    %c0_i32_127 = arith.constant 0 : i32
    %c7_i32_128 = arith.constant 7 : i32
    %c0_i32_129 = arith.constant 0 : i32
    %145 = tpu.memref_slice %arg11[%c7_i32_128, %c0_i32_129] : memref<8x128xf32, #tpu.memory_space<vmem>> -> memref<1x128xf32, #tpu.memory_space<vmem>>
    %c0_i32_130 = arith.constant 0 : i32
    %146 = tpu.memref_slice %arg9[%136, %c0_i32_130] : memref<128x128xf32, #tpu.memory_space<any>> -> memref<1x128xf32, #tpu.memory_space<any>>
    %147 = tpu.memref_slice %arg12[%c0_i32_127] : memref<2x!tpu.dma_semaphore, #tpu.memory_space<semaphore_mem>> -> memref<1x!tpu.dma_semaphore, #tpu.memory_space<semaphore_mem>>
    %148 = tpu.memref_squeeze %147 : memref<1x!tpu.dma_semaphore, #tpu.memory_space<semaphore_mem>> -> memref<!tpu.dma_semaphore, #tpu.memory_space<semaphore_mem>>
    tpu.wait_dma2 semaphore(%148 : memref<!tpu.dma_semaphore, #tpu.memory_space<semaphore_mem>>) src(%145 : memref<1x128xf32, #tpu.memory_space<vmem>>) dst(%146 : memref<1x128xf32, #tpu.memory_space<any>>)
    %c1_i32_131 = arith.constant 1 : i32
    %c7_i32_132 = arith.constant 7 : i32
    %c0_i32_133 = arith.constant 0 : i32
    %149 = tpu.memref_slice %arg8[%c7_i32_132, %c0_i32_133] : memref<8x128xf32, #tpu.memory_space<vmem>> -> memref<1x128xf32, #tpu.memory_space<vmem>>
    %c0_i32_134 = arith.constant 0 : i32
    %150 = tpu.memref_slice %arg10[%136, %c0_i32_134] : memref<128x128xf32, #tpu.memory_space<any>> -> memref<1x128xf32, #tpu.memory_space<any>>
    %151 = tpu.memref_slice %arg12[%c1_i32_131] : memref<2x!tpu.dma_semaphore, #tpu.memory_space<semaphore_mem>> -> memref<1x!tpu.dma_semaphore, #tpu.memory_space<semaphore_mem>>
    %152 = tpu.memref_squeeze %151 : memref<1x!tpu.dma_semaphore, #tpu.memory_space<semaphore_mem>> -> memref<!tpu.dma_semaphore, #tpu.memory_space<semaphore_mem>>
    tpu.wait_dma2 semaphore(%152 : memref<!tpu.dma_semaphore, #tpu.memory_space<semaphore_mem>>) src(%149 : memref<1x128xf32, #tpu.memory_space<vmem>>) dst(%150 : memref<1x128xf32, #tpu.memory_space<any>>)
    return
  }
}

</mosaic_0001>

<llo_original>
// kernel: m2_forward.1
$region0: #{m2_forward.1}
  #allocation0 [shape = 'u32[]', space=smem, size = 0x4, offset = 0x4, fixed_abs, tag = 'smem constant byte address 0x4 - core index']
  #allocation1 [shape = 'u32[144,128]{1,0:T(1,128)}', space=vmem, size = 0x12000, scoped, tag = 'internal scratch']
  #allocation2 [shape = 'f32[8,128]{1,0:T(8,128)}', space=vmem, size = 0x1000, scoped, tag = 'scratch operand']
  #allocation3 [shape = 's32[2]{0}', space=sflag, size = 0x8, scoped, tag = 'scratch operand']
  #allocation13 [shape = 's32[]', space=sflag, size = 0x4, offset = 0, fixed_abs, tag = 'sflag constant byte address 0x0 - dummy sync flag']
  #allocation14 [shape = 's32[]', space=sflag, size = 0x4, offset = 0, fixed_abs, tag = 'sflag constant byte address 0x0 - dummy sync flag']
  #allocation15 [shape = 'u32[]', space=smem, size = 0x4, offset = 0x44, fixed_abs, tag = 'smem constant byte address 0x44 - assertion arg 0']
  #allocation16 [shape = 'u32[]', space=smem, size = 0x4, offset = 0x48, fixed_abs, tag = 'smem constant byte address 0x48 - assertion arg 1']
  #allocation17 [shape = 's32[]', space=sflag, size = 0x4, offset = 0, fixed_abs, tag = 'sflag constant byte address 0x0 - dummy sync flag']
  #allocation18 [shape = 's32[]', space=sflag, size = 0x4, offset = 0, fixed_abs, tag = 'sflag constant byte address 0x0 - dummy sync flag']
  #allocation19 [shape = 's32[]', space=sflag, size = 0x4, offset = 0, fixed_abs, tag = 'sflag constant byte address 0x0 - dummy sync flag']
  #allocation20 [shape = 's32[]', space=sflag, size = 0x4, offset = 0, fixed_abs, tag = 'sflag constant byte address 0x0 - dummy sync flag']
  #allocation21 [shape = 's32[]', space=sflag, size = 0x4, offset = 0, fixed_abs, tag = 'sflag constant byte address 0x0 - dummy sync flag']
  #allocation22 [shape = 's32[]', space=sflag, size = 0x4, offset = 0, fixed_abs, tag = 'sflag constant byte address 0x0 - dummy sync flag']
  #allocation23 [shape = 's32[]', space=sflag, size = 0x4, offset = 0, fixed_abs, tag = 'sflag constant byte address 0x0 - dummy sync flag']
  #allocation24 [shape = 's32[]', space=sflag, size = 0x4, offset = 0, fixed_abs, tag = 'sflag constant byte address 0x0 - dummy sync flag']
  #allocation25 [shape = 's32[]', space=sflag, size = 0x4, offset = 0, fixed_abs, tag = 'sflag constant byte address 0x0 - dummy sync flag']
  #allocation26 [shape = 's32[]', space=sflag, size = 0x4, offset = 0, fixed_abs, tag = 'sflag constant byte address 0x0 - dummy sync flag']
  #allocation27 [shape = 's32[]', space=sflag, size = 0x4, offset = 0, fixed_abs, tag = 'sflag constant byte address 0x0 - dummy sync flag']
  #allocation28 [shape = 's32[]', space=sflag, size = 0x4, offset = 0, fixed_abs, tag = 'sflag constant byte address 0x0 - dummy sync flag']
  #allocation29 [shape = 's32[]', space=sflag, size = 0x4, offset = 0, fixed_abs, tag = 'sflag constant byte address 0x0 - dummy sync flag']
  #allocation30 [shape = 's32[]', space=sflag, size = 0x4, offset = 0, fixed_abs, tag = 'sflag constant byte address 0x0 - dummy sync flag']
  #allocation31 [shape = 's32[]', space=sflag, size = 0x4, offset = 0, fixed_abs, tag = 'sflag constant byte address 0x0 - dummy sync flag']
  #allocation32 [shape = 's32[]', space=sflag, size = 0x4, offset = 0, fixed_abs, tag = 'sflag constant byte address 0x0 - dummy sync flag']
  #allocation33 [shape = 's32[]', space=sflag, size = 0x4, offset = 0, fixed_abs, tag = 'sflag constant byte address 0x0 - dummy sync flag']
  #allocation34 [shape = 's32[]', space=sflag, size = 0x4, offset = 0, fixed_abs, tag = 'sflag constant byte address 0x0 - dummy sync flag']
  #allocation35 [shape = 's32[]', space=sflag, size = 0x4, offset = 0, fixed_abs, tag = 'sflag constant byte address 0x0 - dummy sync flag']
  #allocation36 [shape = 's32[]', space=sflag, size = 0x4, offset = 0, fixed_abs, tag = 'sflag constant byte address 0x0 - dummy sync flag']
  #allocation37 [shape = 's32[]', space=sflag, size = 0x4, offset = 0, fixed_abs, tag = 'sflag constant byte address 0x0 - dummy sync flag']
  #allocation38 [shape = 's32[]', space=sflag, size = 0x4, offset = 0, fixed_abs, tag = 'sflag constant byte address 0x0 - dummy sync flag']
  #allocation39 [shape = 's32[]', space=sflag, size = 0x4, offset = 0, fixed_abs, tag = 'sflag constant byte address 0x0 - dummy sync flag']
  #allocation40 [shape = 's32[]', space=sflag, size = 0x4, offset = 0, fixed_abs, tag = 'sflag constant byte address 0x0 - dummy sync flag']
  #allocation41 [shape = 's32[]', space=sflag, size = 0x4, offset = 0, fixed_abs, tag = 'sflag constant byte address 0x0 - dummy sync flag']
  #allocation42 [shape = 's32[]', space=sflag, size = 0x4, offset = 0, fixed_abs, tag = 'sflag constant byte address 0x0 - dummy sync flag']
  #allocation43 [shape = 's32[]', space=sflag, size = 0x4, offset = 0, fixed_abs, tag = 'sflag constant byte address 0x0 - dummy sync flag']
  #allocation44 [shape = 's32[]', space=sflag, size = 0x4, offset = 0, fixed_abs, tag = 'sflag constant byte address 0x0 - dummy sync flag']
  #allocation45 [shape = 's32[]', space=sflag, size = 0x4, offset = 0, fixed_abs, tag = 'sflag constant byte address 0x0 - dummy sync flag']
  #allocation46 [shape = 's32[]', space=sflag, size = 0x4, offset = 0, fixed_abs, tag = 'sflag constant byte address 0x0 - dummy sync flag']
  %s0 = inlined_call_operand.vmem [shape: s32[8], index: 0, kind: input, shape index: {}]
  %s1 = inlined_call_operand.hbm [shape: f32[8,128], index: 1, kind: input, shape index: {}]
  %s2 = inlined_call_operand.hbm [shape: bf16[128,128], index: 2, kind: input, shape index: {}]
  %s3 = inlined_call_operand.vmem [shape: f32[1,128], index: 3, kind: input, shape index: {}]
  %s4 = inlined_call_operand.hbm [shape: bf16[128,128], index: 4, kind: input, shape index: {}]
  %s5 = inlined_call_operand.vmem [shape: f32[1,128], index: 5, kind: input, shape index: {}]
  %s6 = inlined_call_operand.hbm [shape: f32[128,128], index: 6, kind: input, shape index: {}, may-alias: {6,9}]
  %s7 = inlined_call_operand.hbm [shape: f32[128,128], index: 7, kind: input, shape index: {}, may-alias: {7,10}]
  %s8 = inlined_call_operand.hbm [shape: f32[8,128], index: 8, kind: output, shape index: {0}]
  %s9 = inlined_call_operand.hbm [shape: f32[128,128], index: 9, kind: output, shape index: {1}, may-alias: {6,9}]
  %s10 = inlined_call_operand.hbm [shape: f32[128,128], index: 10, kind: output, shape index: {2}, may-alias: {7,10}]
  %11 = xla_tuple %s8, %s9, %s10
  %s12 = sld [smem:[#allocation0]]
  $region114: #{m2_forward.1} parent=0
    _
  %s14 = ssub.s32 1, %s12
  %s15 = scalar_select 0, %s14, %s12
  $region1: #{m2_forward.1} parent=0
    #allocation4 [shape = 'u8[512]{0}', space=smem, size = 0x200, scoped, tag = 'input window, operand 0, single buffered']
    #allocation5 [shape = 's32[1]{0}', space=sflag, size = 0x4, scoped, tag = 'scoped memory for m2_forward.1']
    #allocation6 [shape = 's32[1]{0}', space=sflag, size = 0x4, scoped, tag = 'scoped memory for m2_forward.1']
    #allocation7 [shape = 's32[1]{0}', space=sflag, size = 0x4, scoped, tag = 'scoped memory for m2_forward.1']
    #allocation8 [shape = 'u8[4096]{0}', space=vmem, size = 0x1000, scoped, tag = 'input window, operand 1, single buffered']
    #allocation9 [shape = 'u8[32768]{0}', space=vmem, size = 0x8000, scoped, tag = 'input window, operand 2, single buffered']
    #allocation10 [shape = 's32[1]{0}', space=sflag, size = 0x4, scoped, tag = 'scoped memory for m2_forward.1']
    #allocation11 [shape = 'u8[32768]{0}', space=vmem, size = 0x8000, scoped, tag = 'input window, operand 4, single buffered']
    #allocation12 [shape = 'u8[4096]{0}', space=vmem, size = 0x1000, scoped, tag = 'output window, operand 0, single buffered']
    %16 = vsyncpa [#allocation7], 0
    %17 = vsyncpa [#allocation5], 0
    %18 = vsyncpa [#allocation10], 0
    %19 = vsyncpa [#allocation6], 0
    // Predicated region
    $region2: #{m2_forward.1} parent=1 // pred_check
      _
    $region3: #{m2_forward.1} parent=1 // pred_check_branch
      %21 = sbr.rel (0) target = $region5
    $region4: #{m2_forward.1} parent=1 // pred_region
      %s23 = ssub.s32 16, 16
      %24 = vsyncadd [#allocation7], %s23
      %s26 = sshll.u32 %s0, 4
      %s27 = int_to_ptr.vmem [resolvable:$true] %s26
      %29 = dma.vmem_to_smem %s27, 16, [#allocation4], [#allocation7]
    $region5: #{m2_forward.1} parent=1 // pred_fallthru
      _
    // Predicated region
    $region6: #{m2_forward.1} parent=1 // pred_check
      _
    $region7: #{m2_forward.1} parent=1 // pred_check_branch
      %31 = sbr.rel (0) target = $region9
    $region8: #{m2_forward.1} parent=1 // pred_region
      %s33 = ssub.s32 128, 128
      %34 = vsyncadd [#allocation5], %s33
      %s36 = sshll.u32 [#allocation8], 4
      %s37 = int_to_ptr.vmem [resolvable:$true] %s36
      %39 = dma.hbm_to_vmem [thread:$0]  %s1, 128, %s37, [#allocation5]
    $region9: #{m2_forward.1} parent=1 // pred_fallthru
      _
    // Predicated region
    $region10: #{m2_forward.1} parent=1 // pred_check
      _
    $region11: #{m2_forward.1} parent=1 // pred_check_branch
      %41 = sbr.rel (0) target = $region13
    $region12: #{m2_forward.1} parent=1 // pred_region
      %s43 = ssub.s32 1024, 1024
      %44 = vsyncadd [#allocation10], %s43
      %s45 = sshll.u32 [#allocation9], 4
      %s46 = int_to_ptr.vmem [resolvable:$true] %s45
      %51 = dma.hbm_to_vmem [thread:$0]  %s2, 1024, %s46, [#allocation10], 64, 64, 4
    $region13: #{m2_forward.1} parent=1 // pred_fallthru
      _
    // Predicated region
    $region14: #{m2_forward.1} parent=1 // pred_check
      _
    $region15: #{m2_forward.1} parent=1 // pred_check_branch
      %53 = sbr.rel (0) target = $region17
    $region16: #{m2_forward.1} parent=1 // pred_region
      _
    $region17: #{m2_forward.1} parent=1 // pred_fallthru
      _
    // Predicated region
    $region18: #{m2_forward.1} parent=1 // pred_check
      _
    $region19: #{m2_forward.1} parent=1 // pred_check_branch
      %55 = sbr.rel (0) target = $region21
    $region20: #{m2_forward.1} parent=1 // pred_region
      %s57 = ssub.s32 1024, 1024
      %58 = vsyncadd [#allocation10], %s57
      %s59 = sshll.u32 [#allocation11], 4
      %s60 = int_to_ptr.vmem [resolvable:$true] %s59
      %65 = dma.hbm_to_vmem [thread:$0]  %s4, 1024, %s60, [#allocation10], 64, 64, 4
    $region21: #{m2_forward.1} parent=1 // pred_fallthru
      _
    // Predicated region
    $region22: #{m2_forward.1} parent=1 // pred_check
      _
    $region23: #{m2_forward.1} parent=1 // pred_check_branch
      %67 = sbr.rel (0) target = $region25
    $region24: #{m2_forward.1} parent=1 // pred_region
      _
    $region25: #{m2_forward.1} parent=1 // pred_fallthru
      _
    // Predicated region
    $region26: #{m2_forward.1} parent=1 // pred_check
      _
    $region27: #{m2_forward.1} parent=1 // pred_check_branch
      %69 = sbr.rel (0) target = $region29
    $region28: #{m2_forward.1} parent=1 // pred_region
      %70 = dma.done [#allocation7], 16
    $region29: #{m2_forward.1} parent=1 // pred_fallthru
      _
    // Predicated region
    $region30: #{m2_forward.1} parent=1 // pred_check
      _
    $region31: #{m2_forward.1} parent=1 // pred_check_branch
      %72 = sbr.rel (0) target = $region33
    $region32: #{m2_forward.1} parent=1 // pred_region
      %73 = dma.done [#allocation5], 128
    $region33: #{m2_forward.1} parent=1 // pred_fallthru
      _
    // Predicated region
    $region34: #{m2_forward.1} parent=1 // pred_check
      _
    $region35: #{m2_forward.1} parent=1 // pred_check_branch
      %75 = sbr.rel (0) target = $region37
    $region36: #{m2_forward.1} parent=1 // pred_region
      %76 = dma.done [#allocation10], 1024
    $region37: #{m2_forward.1} parent=1 // pred_fallthru
      _
    // Predicated region
    $region38: #{m2_forward.1} parent=1 // pred_check
      _
    $region39: #{m2_forward.1} parent=1 // pred_check_branch
      %78 = sbr.rel (0) target = $region41
    $region40: #{m2_forward.1} parent=1 // pred_region
      %79 = dma.done [#allocation10], 1024
    $region41: #{m2_forward.1} parent=1 // pred_fallthru
      _
    %80 = sfence
    %v82 = vld [vmem:[#allocation8] sm:$0xff]
    %v83 = vld [vmem:[%s3] sm:$0x1]
    %v84 = vld [vmem:[%s5] sm:$0x1]
    %v85 = vpack.c.bf16 %v82, %v82
    %v86 = vld [vmem:[#allocation9] sm:$0xf]
    %v87 = vld [vmem:[#allocation9 + $0x4] sm:$0xf]
    %v88 = vld [vmem:[#allocation9 + $0x8] sm:$0xf]
    %v89 = vld [vmem:[#allocation9 + $0xc] sm:$0xf]
    %v90 = vld [vmem:[#allocation9 + $0x10] sm:$0xf]
    %v91 = vld [vmem:[#allocation9 + $0x14] sm:$0xf]
    %v92 = vld [vmem:[#allocation9 + $0x18] sm:$0xf]
    %v93 = vld [vmem:[#allocation9 + $0x1c] sm:$0xf]
    %v94 = vld [vmem:[#allocation9 + $0x20] sm:$0xf]
    %v95 = vld [vmem:[#allocation9 + $0x24] sm:$0xf]
    %v96 = vld [vmem:[#allocation9 + $0x28] sm:$0xf]
    %v97 = vld [vmem:[#allocation9 + $0x2c] sm:$0xf]
    %v98 = vld [vmem:[#allocation9 + $0x30] sm:$0xf]
    %v99 = vld [vmem:[#allocation9 + $0x34] sm:$0xf]
    %v100 = vld [vmem:[#allocation9 + $0x38] sm:$0xf]
    %v101 = vld [vmem:[#allocation9 + $0x3c] sm:$0xf]
    %v118 = vunpack.c.l.b16 %v86
    %v119 = vunpack.c.l.b16 %v87
    %v120 = vunpack.c.l.b16 %v88
    %v121 = vunpack.c.l.b16 %v89
    %v122 = vunpack.c.l.b16 %v90
    %v123 = vunpack.c.l.b16 %v91
    %v124 = vunpack.c.l.b16 %v92
    %v125 = vunpack.c.l.b16 %v93
    %v126 = vunpack.c.l.b16 %v94
    %v127 = vunpack.c.l.b16 %v95
    %v128 = vunpack.c.l.b16 %v96
    %v129 = vunpack.c.l.b16 %v97
    %v130 = vunpack.c.l.b16 %v98
    %v131 = vunpack.c.l.b16 %v99
    %v132 = vunpack.c.l.b16 %v100
    %v133 = vunpack.c.l.b16 %v101
    %v134 = vpack.c.b16 %v119, %v118
    %v135 = vpack.c.b16 %v121, %v120
    %v136 = vpack.c.b16 %v123, %v122
    %v137 = vpack.c.b16 %v125, %v124
    %v138 = vpack.c.b16 %v127, %v126
    %v139 = vpack.c.b16 %v129, %v128
    %v140 = vpack.c.b16 %v131, %v130
    %v141 = vpack.c.b16 %v133, %v132
    %150 = vmatprep.subr.bf16.mxu0 0
    %151 = vmatpush1.bf16.xpose.msra.mxu0 %v134
    %152 = vmatprep.subr.bf16.mxu0 0
    %153 = vmatpush1.bf16.xpose.msra.mxu0 %v135
    %154 = vmatprep.subr.bf16.mxu0 0
    %155 = vmatpush1.bf16.xpose.msra.mxu0 %v136
    %156 = vmatprep.subr.bf16.mxu0 0
    %157 = vmatpush1.bf16.xpose.msra.mxu0 %v137
    %158 = vmatprep.subr.bf16.mxu0 0
    %159 = vmatpush1.bf16.xpose.msra.mxu0 %v138
    %160 = vmatprep.subr.bf16.mxu0 0
    %161 = vmatpush1.bf16.xpose.msra.mxu0 %v139
    %162 = vmatprep.subr.bf16.mxu0 0
    %163 = vmatpush1.bf16.xpose.msra.mxu0 %v140
    %164 = vmatprep.subr.bf16.mxu0 0
    %165 = vmatpush1.bf16.xpose.msra.mxu0 %v141
    %166 = vmatprep.subr.bf16.mxu0 0
    %167 = vmatpush1.bf16.xpose.msra.mxu0 0
    %168 = vmatprep.subr.bf16.mxu0 0
    %169 = vmatpush1.bf16.xpose.msra.mxu0 0
    %170 = vmatprep.subr.bf16.mxu0 0
    %171 = vmatpush1.bf16.xpose.msra.mxu0 0
    %172 = vmatprep.subr.bf16.mxu0 0
    %173 = vmatpush1.bf16.xpose.msra.mxu0 0
    %174 = vmatprep.subr.bf16.mxu0 0
    %175 = vmatpush1.bf16.xpose.msra.mxu0 0
    %176 = vmatprep.subr.bf16.mxu0 0
    %177 = vmatpush1.bf16.xpose.msra.mxu0 0
    %178 = vmatprep.subr.bf16.mxu0 0
    %179 = vmatpush1.bf16.xpose.msra.mxu0 0
    %180 = vmatprep.subr.bf16.mxu0 0
    %181 = vmatpush1.bf16.xpose.msra.mxu0 0
    %182 = vmatprep.mubr.bf16.mxu0 0
    %183 = vmatmul.mubr.bf16.gmra.mrb[0].mxu0 %v85
    %v184 = vpop.f32.mrb[0].mxu0
    %v185 = vadd.f32 0.0, %v184
    %v186 = vpop.f32.mrb[0].mxu0
    %v187 = vpop.f32.mrb[0].mxu0
    %v188 = vpop.f32.mrb[0].mxu0
    %189 = vdwg.mxu0
    %v190 = vadd.f32 %v82, %v185
    %v192 = vlaneseq
    %v193 = vshrl.u32 %v192, 7
    %v194 = vsub.s32 0, %v193
    %v195 = vrot.slane %v83, %v194
    %v197 = vadd.f32 %v190, %v195
    %198 = vst [vmem:[#allocation2] sm:$0xff] %v197
    %v199 = vpack.c.bf16 %v197, %v197
    %v200 = vld [vmem:[#allocation11] sm:$0xf]
    %v201 = vld [vmem:[#allocation11 + $0x4] sm:$0xf]
    %v202 = vld [vmem:[#allocation11 + $0x8] sm:$0xf]
    %v203 = vld [vmem:[#allocation11 + $0xc] sm:$0xf]
    %v204 = vld [vmem:[#allocation11 + $0x10] sm:$0xf]
    %v205 = vld [vmem:[#allocation11 + $0x14] sm:$0xf]
    %v206 = vld [vmem:[#allocation11 + $0x18] sm:$0xf]
    %v207 = vld [vmem:[#allocation11 + $0x1c] sm:$0xf]
    %v208 = vld [vmem:[#allocation11 + $0x20] sm:$0xf]
    %v209 = vld [vmem:[#allocation11 + $0x24] sm:$0xf]
    %v210 = vld [vmem:[#allocation11 + $0x28] sm:$0xf]
    %v211 = vld [vmem:[#allocation11 + $0x2c] sm:$0xf]
    %v212 = vld [vmem:[#allocation11 + $0x30] sm:$0xf]
    %v213 = vld [vmem:[#allocation11 + $0x34] sm:$0xf]
    %v214 = vld [vmem:[#allocation11 + $0x38] sm:$0xf]
    %v215 = vld [vmem:[#allocation11 + $0x3c] sm:$0xf]
    %v232 = vunpack.c.l.b16 %v200
    %v233 = vunpack.c.l.b16 %v201
    %v234 = vunpack.c.l.b16 %v202
    %v235 = vunpack.c.l.b16 %v203
    %v236 = vunpack.c.l.b16 %v204
    %v237 = vunpack.c.l.b16 %v205
    %v238 = vunpack.c.l.b16 %v206
    %v239 = vunpack.c.l.b16 %v207
    %v240 = vunpack.c.l.b16 %v208
    %v241 = vunpack.c.l.b16 %v209
    %v242 = vunpack.c.l.b16 %v210
    %v243 = vunpack.c.l.b16 %v211
    %v244 = vunpack.c.l.b16 %v212
    %v245 = vunpack.c.l.b16 %v213
    %v246 = vunpack.c.l.b16 %v214
    %v247 = vunpack.c.l.b16 %v215
    %v248 = vpack.c.b16 %v233, %v232
    %v249 = vpack.c.b16 %v235, %v234
    %v250 = vpack.c.b16 %v237, %v236
    %v251 = vpack.c.b16 %v239, %v238
    %v252 = vpack.c.b16 %v241, %v240
    %v253 = vpack.c.b16 %v243, %v242
    %v254 = vpack.c.b16 %v245, %v244
    %v255 = vpack.c.b16 %v247, %v246
    %264 = vmatprep.subr.bf16.mxu0 0
    %265 = vmatpush1.bf16.xpose.msra.mxu0 %v248
    %266 = vmatprep.subr.bf16.mxu0 0
    %267 = vmatpush1.bf16.xpose.msra.mxu0 %v249
    %268 = vmatprep.subr.bf16.mxu0 0
    %269 = vmatpush1.bf16.xpose.msra.mxu0 %v250
    %270 = vmatprep.subr.bf16.mxu0 0
    %271 = vmatpush1.bf16.xpose.msra.mxu0 %v251
    %272 = vmatprep.subr.bf16.mxu0 0
    %273 = vmatpush1.bf16.xpose.msra.mxu0 %v252
    %274 = vmatprep.subr.bf16.mxu0 0
    %275 = vmatpush1.bf16.xpose.msra.mxu0 %v253
    %276 = vmatprep.subr.bf16.mxu0 0
    %277 = vmatpush1.bf16.xpose.msra.mxu0 %v254
    %278 = vmatprep.subr.bf16.mxu0 0
    %279 = vmatpush1.bf16.xpose.msra.mxu0 %v255
    %280 = vmatprep.subr.bf16.mxu0 0
    %281 = vmatpush1.bf16.xpose.msra.mxu0 0
    %282 = vmatprep.subr.bf16.mxu0 0
    %283 = vmatpush1.bf16.xpose.msra.mxu0 0
    %284 = vmatprep.subr.bf16.mxu0 0
    %285 = vmatpush1.bf16.xpose.msra.mxu0 0
    %286 = vmatprep.subr.bf16.mxu0 0
    %287 = vmatpush1.bf16.xpose.msra.mxu0 0
    %288 = vmatprep.subr.bf16.mxu0 0
    %289 = vmatpush1.bf16.xpose.msra.mxu0 0
    %290 = vmatprep.subr.bf16.mxu0 0
    %291 = vmatpush1.bf16.xpose.msra.mxu0 0
    %292 = vmatprep.subr.bf16.mxu0 0
    %293 = vmatpush1.bf16.xpose.msra.mxu0 0
    %294 = vmatprep.subr.bf16.mxu0 0
    %295 = vmatpush1.bf16.xpose.msra.mxu0 0
    %296 = vmatprep.mubr.bf16.mxu0 0
    %297 = vmatmul.mubr.bf16.gmra.mrb[0].mxu0 %v199
    %v298 = vpop.f32.mrb[0].mxu0
    %v299 = vadd.f32 0.0, %v298
    %v300 = vpop.f32.mrb[0].mxu0
    %v301 = vpop.f32.mrb[0].mxu0
    %v302 = vpop.f32.mrb[0].mxu0
    %303 = vdwg.mxu0
    %v304 = vadd.f32 %v197, %v299
    %v306 = vlaneseq
    %v307 = vshrl.u32 %v306, 7
    %v308 = vsub.s32 0, %v307
    %v309 = vrot.slane %v84, %v308
    %v311 = vadd.f32 %v304, %v309
    %312 = vst [vmem:[#allocation12] sm:$0xff] %v311
    %s313 = sld [smem:[#allocation4]]
    %s314 = smul.addr %s313, 16
    %s315 = scalar_lea.hbm %s9, %s314
    // Predicated region
    $region42: #{m2_forward.1} parent=1 // pred_check
      _
    $region43: #{m2_forward.1} parent=1 // pred_check_branch
      %317 = sbr.rel target = $region45
    $region44: #{m2_forward.1} parent=1 // pred_region
      %318 = sst [smem:[#allocation15]] [#allocation14]
      %319 = sst [smem:[#allocation16]] [#allocation13]
    $region45: #{m2_forward.1} parent=1 // pred_fallthru
      _
    %321 = shalt.err (0)
    %s323 = sshll.u32 [#allocation2], 4
    %s324 = int_to_ptr.vmem [resolvable:$true] %s323
    %326 = dma.vmem_to_hbm [thread:$0]  %s324, 16, %s315, [#allocation3]
    %s327 = smul.addr %s313, 16
    %s328 = scalar_lea.hbm %s10, %s327
    %s329 = scalar_lea.sflag [#allocation3], 1
    // Predicated region
    $region46: #{m2_forward.1} parent=1 // pred_check
      _
    $region47: #{m2_forward.1} parent=1 // pred_check_branch
      %331 = sbr.rel target = $region49
    $region48: #{m2_forward.1} parent=1 // pred_region
      %332 = sst [smem:[#allocation15]] [#allocation18]
      %333 = sst [smem:[#allocation16]] [#allocation17]
    $region49: #{m2_forward.1} parent=1 // pred_fallthru
      _
    %335 = shalt.err (0)
    %s337 = sshll.u32 [#allocation12], 4
    %s338 = int_to_ptr.vmem [resolvable:$true] %s337
    %340 = dma.vmem_to_hbm [thread:$0]  %s338, 16, %s328, %s329
    %s341 = smul.u32 1, 1
    %s342 = sshll.u32 %s341, 4
    %343 = dma.done [#allocation3], %s342
    %s344 = sshll.u32 %s341, 4
    %345 = dma.done %s329, %s344
    %s346 = sld [smem:[#allocation4 + $0x1]]
    %s347 = scalar_lea.vmem [#allocation2], 1
    %s348 = smul.addr %s346, 16
    %s349 = scalar_lea.hbm %s9, %s348
    // Predicated region
    $region50: #{m2_forward.1} parent=1 // pred_check
      _
    $region51: #{m2_forward.1} parent=1 // pred_check_branch
      %351 = sbr.rel target = $region53
    $region52: #{m2_forward.1} parent=1 // pred_region
      %352 = sst [smem:[#allocation15]] [#allocation20]
      %353 = sst [smem:[#allocation16]] [#allocation19]
    $region53: #{m2_forward.1} parent=1 // pred_fallthru
      _
    %355 = shalt.err (0)
    %s357 = sshll.u32 %s347, 4
    %s358 = int_to_ptr.vmem [resolvable:$true] %s357
    %360 = dma.vmem_to_hbm [thread:$0]  %s358, 16, %s349, [#allocation3]
    %s361 = scalar_lea.vmem [#allocation12], 1
    %s362 = smul.addr %s346, 16
    %s363 = scalar_lea.hbm %s10, %s362
    // Predicated region
    $region54: #{m2_forward.1} parent=1 // pred_check
      _
    $region55: #{m2_forward.1} parent=1 // pred_check_branch
      %365 = sbr.rel target = $region57
    $region56: #{m2_forward.1} parent=1 // pred_region
      %366 = sst [smem:[#allocation15]] [#allocation22]
      %367 = sst [smem:[#allocation16]] [#allocation21]
    $region57: #{m2_forward.1} parent=1 // pred_fallthru
      _
    %369 = shalt.err (0)
    %s371 = sshll.u32 %s361, 4
    %s372 = int_to_ptr.vmem [resolvable:$true] %s371
    %374 = dma.vmem_to_hbm [thread:$0]  %s372, 16, %s363, %s329
    %s375 = sshll.u32 %s341, 4
    %376 = dma.done [#allocation3], %s375
    %s377 = sshll.u32 %s341, 4
    %378 = dma.done %s329, %s377
    %s379 = sld [smem:[#allocation4 + $0x2]]
    %s380 = scalar_lea.vmem [#allocation2], 2
    %s381 = smul.addr %s379, 16
    %s382 = scalar_lea.hbm %s9, %s381
    // Predicated region
    $region58: #{m2_forward.1} parent=1 // pred_check
      _
    $region59: #{m2_forward.1} parent=1 // pred_check_branch
      %384 = sbr.rel target = $region61
    $region60: #{m2_forward.1} parent=1 // pred_region
      %385 = sst [smem:[#allocation15]] [#allocation24]
      %386 = sst [smem:[#allocation16]] [#allocation23]
    $region61: #{m2_forward.1} parent=1 // pred_fallthru
      _
    %388 = shalt.err (0)
    %s390 = sshll.u32 %s380, 4
    %s391 = int_to_ptr.vmem [resolvable:$true] %s390
    %393 = dma.vmem_to_hbm [thread:$0]  %s391, 16, %s382, [#allocation3]
    %s394 = scalar_lea.vmem [#allocation12], 2
    %s395 = smul.addr %s379, 16
    %s396 = scalar_lea.hbm %s10, %s395
    // Predicated region
    $region62: #{m2_forward.1} parent=1 // pred_check
      _
    $region63: #{m2_forward.1} parent=1 // pred_check_branch
      %398 = sbr.rel target = $region65
    $region64: #{m2_forward.1} parent=1 // pred_region
      %399 = sst [smem:[#allocation15]] [#allocation26]
      %400 = sst [smem:[#allocation16]] [#allocation25]
    $region65: #{m2_forward.1} parent=1 // pred_fallthru
      _
    %402 = shalt.err (0)
    %s404 = sshll.u32 %s394, 4
    %s405 = int_to_ptr.vmem [resolvable:$true] %s404
    %407 = dma.vmem_to_hbm [thread:$0]  %s405, 16, %s396, %s329
    %s408 = sshll.u32 %s341, 4
    %409 = dma.done [#allocation3], %s408
    %s410 = sshll.u32 %s341, 4
    %411 = dma.done %s329, %s410
    %s412 = sld [smem:[#allocation4 + $0x3]]
    %s413 = scalar_lea.vmem [#allocation2], 3
    %s414 = smul.addr %s412, 16
    %s415 = scalar_lea.hbm %s9, %s414
    // Predicated region
    $region66: #{m2_forward.1} parent=1 // pred_check
      _
    $region67: #{m2_forward.1} parent=1 // pred_check_branch
      %417 = sbr.rel target = $region69
    $region68: #{m2_forward.1} parent=1 // pred_region
      %418 = sst [smem:[#allocation15]] [#allocation28]
      %419 = sst [smem:[#allocation16]] [#allocation27]
    $region69: #{m2_forward.1} parent=1 // pred_fallthru
      _
    %421 = shalt.err (0)
    %s423 = sshll.u32 %s413, 4
    %s424 = int_to_ptr.vmem [resolvable:$true] %s423
    %426 = dma.vmem_to_hbm [thread:$0]  %s424, 16, %s415, [#allocation3]
    %s427 = scalar_lea.vmem [#allocation12], 3
    %s428 = smul.addr %s412, 16
    %s429 = scalar_lea.hbm %s10, %s428
    // Predicated region
    $region70: #{m2_forward.1} parent=1 // pred_check
      _
    $region71: #{m2_forward.1} parent=1 // pred_check_branch
      %431 = sbr.rel target = $region73
    $region72: #{m2_forward.1} parent=1 // pred_region
      %432 = sst [smem:[#allocation15]] [#allocation30]
      %433 = sst [smem:[#allocation16]] [#allocation29]
    $region73: #{m2_forward.1} parent=1 // pred_fallthru
      _
    %435 = shalt.err (0)
    %s437 = sshll.u32 %s427, 4
    %s438 = int_to_ptr.vmem [resolvable:$true] %s437
    %440 = dma.vmem_to_hbm [thread:$0]  %s438, 16, %s429, %s329
    %s441 = sshll.u32 %s341, 4
    %442 = dma.done [#allocation3], %s441
    %s443 = sshll.u32 %s341, 4
    %444 = dma.done %s329, %s443
    %s445 = sld [smem:[#allocation4 + $0x4]]
    %s446 = scalar_lea.vmem [#allocation2], 4
    %s447 = smul.addr %s445, 16
    %s448 = scalar_lea.hbm %s9, %s447
    // Predicated region
    $region74: #{m2_forward.1} parent=1 // pred_check
      _
    $region75: #{m2_forward.1} parent=1 // pred_check_branch
      %450 = sbr.rel target = $region77
    $region76: #{m2_forward.1} parent=1 // pred_region
      %451 = sst [smem:[#allocation15]] [#allocation32]
      %452 = sst [smem:[#allocation16]] [#allocation31]
    $region77: #{m2_forward.1} parent=1 // pred_fallthru
      _
    %454 = shalt.err (0)
    %s456 = sshll.u32 %s446, 4
    %s457 = int_to_ptr.vmem [resolvable:$true] %s456
    %459 = dma.vmem_to_hbm [thread:$0]  %s457, 16, %s448, [#allocation3]
    %s460 = scalar_lea.vmem [#allocation12], 4
    %s461 = smul.addr %s445, 16
    %s462 = scalar_lea.hbm %s10, %s461
    // Predicated region
    $region78: #{m2_forward.1} parent=1 // pred_check
      _
    $region79: #{m2_forward.1} parent=1 // pred_check_branch
      %464 = sbr.rel target = $region81
    $region80: #{m2_forward.1} parent=1 // pred_region
      %465 = sst [smem:[#allocation15]] [#allocation34]
      %466 = sst [smem:[#allocation16]] [#allocation33]
    $region81: #{m2_forward.1} parent=1 // pred_fallthru
      _
    %468 = shalt.err (0)
    %s470 = sshll.u32 %s460, 4
    %s471 = int_to_ptr.vmem [resolvable:$true] %s470
    %473 = dma.vmem_to_hbm [thread:$0]  %s471, 16, %s462, %s329
    %s474 = sshll.u32 %s341, 4
    %475 = dma.done [#allocation3], %s474
    %s476 = sshll.u32 %s341, 4
    %477 = dma.done %s329, %s476
    %s478 = sld [smem:[#allocation4 + $0x5]]
    %s479 = scalar_lea.vmem [#allocation2], 5
    %s480 = smul.addr %s478, 16
    %s481 = scalar_lea.hbm %s9, %s480
    // Predicated region
    $region82: #{m2_forward.1} parent=1 // pred_check
      _
    $region83: #{m2_forward.1} parent=1 // pred_check_branch
      %483 = sbr.rel target = $region85
    $region84: #{m2_forward.1} parent=1 // pred_region
      %484 = sst [smem:[#allocation15]] [#allocation36]
      %485 = sst [smem:[#allocation16]] [#allocation35]
    $region85: #{m2_forward.1} parent=1 // pred_fallthru
      _
    %487 = shalt.err (0)
    %s489 = sshll.u32 %s479, 4
    %s490 = int_to_ptr.vmem [resolvable:$true] %s489
    %492 = dma.vmem_to_hbm [thread:$0]  %s490, 16, %s481, [#allocation3]
    %s493 = scalar_lea.vmem [#allocation12], 5
    %s494 = smul.addr %s478, 16
    %s495 = scalar_lea.hbm %s10, %s494
    // Predicated region
    $region86: #{m2_forward.1} parent=1 // pred_check
      _
    $region87: #{m2_forward.1} parent=1 // pred_check_branch
      %497 = sbr.rel target = $region89
    $region88: #{m2_forward.1} parent=1 // pred_region
      %498 = sst [smem:[#allocation15]] [#allocation38]
      %499 = sst [smem:[#allocation16]] [#allocation37]
    $region89: #{m2_forward.1} parent=1 // pred_fallthru
      _
    %501 = shalt.err (0)
    %s503 = sshll.u32 %s493, 4
    %s504 = int_to_ptr.vmem [resolvable:$true] %s503
    %506 = dma.vmem_to_hbm [thread:$0]  %s504, 16, %s495, %s329
    %s507 = sshll.u32 %s341, 4
    %508 = dma.done [#allocation3], %s507
    %s509 = sshll.u32 %s341, 4
    %510 = dma.done %s329, %s509
    %s511 = sld [smem:[#allocation4 + $0x6]]
    %s512 = scalar_lea.vmem [#allocation2], 6
    %s513 = smul.addr %s511, 16
    %s514 = scalar_lea.hbm %s9, %s513
    // Predicated region
    $region90: #{m2_forward.1} parent=1 // pred_check
      _
    $region91: #{m2_forward.1} parent=1 // pred_check_branch
      %516 = sbr.rel target = $region93
    $region92: #{m2_forward.1} parent=1 // pred_region
      %517 = sst [smem:[#allocation15]] [#allocation40]
      %518 = sst [smem:[#allocation16]] [#allocation39]
    $region93: #{m2_forward.1} parent=1 // pred_fallthru
      _
    %520 = shalt.err (0)
    %s522 = sshll.u32 %s512, 4
    %s523 = int_to_ptr.vmem [resolvable:$true] %s522
    %525 = dma.vmem_to_hbm [thread:$0]  %s523, 16, %s514, [#allocation3]
    %s526 = scalar_lea.vmem [#allocation12], 6
    %s527 = smul.addr %s511, 16
    %s528 = scalar_lea.hbm %s10, %s527
    // Predicated region
    $region94: #{m2_forward.1} parent=1 // pred_check
      _
    $region95: #{m2_forward.1} parent=1 // pred_check_branch
      %530 = sbr.rel target = $region97
    $region96: #{m2_forward.1} parent=1 // pred_region
      %531 = sst [smem:[#allocation15]] [#allocation42]
      %532 = sst [smem:[#allocation16]] [#allocation41]
    $region97: #{m2_forward.1} parent=1 // pred_fallthru
      _
    %534 = shalt.err (0)
    %s536 = sshll.u32 %s526, 4
    %s537 = int_to_ptr.vmem [resolvable:$true] %s536
    %539 = dma.vmem_to_hbm [thread:$0]  %s537, 16, %s528, %s329
    %s540 = sshll.u32 %s341, 4
    %541 = dma.done [#allocation3], %s540
    %s542 = sshll.u32 %s341, 4
    %543 = dma.done %s329, %s542
    %s544 = sld [smem:[#allocation4 + $0x7]]
    %s545 = scalar_lea.vmem [#allocation2], 7
    %s546 = smul.addr %s544, 16
    %s547 = scalar_lea.hbm %s9, %s546
    // Predicated region
    $region98: #{m2_forward.1} parent=1 // pred_check
      _
    $region99: #{m2_forward.1} parent=1 // pred_check_branch
      %549 = sbr.rel target = $region101
    $region100: #{m2_forward.1} parent=1 // pred_region
      %550 = sst [smem:[#allocation15]] [#allocation44]
      %551 = sst [smem:[#allocation16]] [#allocation43]
    $region101: #{m2_forward.1} parent=1 // pred_fallthru
      _
    %553 = shalt.err (0)
    %s555 = sshll.u32 %s545, 4
    %s556 = int_to_ptr.vmem [resolvable:$true] %s555
    %558 = dma.vmem_to_hbm [thread:$0]  %s556, 16, %s547, [#allocation3]
    %s559 = scalar_lea.vmem [#allocation12], 7
    %s560 = smul.addr %s544, 16
    %s561 = scalar_lea.hbm %s10, %s560
    // Predicated region
    $region102: #{m2_forward.1} parent=1 // pred_check
      _
    $region103: #{m2_forward.1} parent=1 // pred_check_branch
      %563 = sbr.rel target = $region105
    $region104: #{m2_forward.1} parent=1 // pred_region
      %564 = sst [smem:[#allocation15]] [#allocation46]
      %565 = sst [smem:[#allocation16]] [#allocation45]
    $region105: #{m2_forward.1} parent=1 // pred_fallthru
      _
    %567 = shalt.err (0)
    %s569 = sshll.u32 %s559, 4
    %s570 = int_to_ptr.vmem [resolvable:$true] %s569
    %572 = dma.vmem_to_hbm [thread:$0]  %s570, 16, %s561, %s329
    %s573 = sshll.u32 %s341, 4
    %574 = dma.done [#allocation3], %s573
    %s575 = sshll.u32 %s341, 4
    %576 = dma.done %s329, %s575
    // Predicated region
    $region106: #{m2_forward.1} parent=1 // pred_check
      _
    $region107: #{m2_forward.1} parent=1 // pred_check_branch
      %578 = sbr.rel (0) target = $region109
    $region108: #{m2_forward.1} parent=1 // pred_region
      %s580 = ssub.s32 128, 128
      %581 = vsyncadd [#allocation6], %s580
      %s583 = sshll.u32 [#allocation12], 4
      %s584 = int_to_ptr.vmem [resolvable:$true] %s583
      %586 = dma.vmem_to_hbm [thread:$0]  %s584, 128, %s8, [#allocation6]
    $region109: #{m2_forward.1} parent=1 // pred_fallthru
      _
    // Predicated region
    $region110: #{m2_forward.1} parent=1 // pred_check
      _
    $region111: #{m2_forward.1} parent=1 // pred_check_branch
      %588 = sbr.rel (0) target = $region113
    $region112: #{m2_forward.1} parent=1 // pred_region
      %589 = dma.done [#allocation6], 128
    $region113: #{m2_forward.1} parent=1 // pred_fallthru
      _
    %590 = vsyncpa [#allocation5], 1
    %591 = vsyncpa [#allocation10], 1
    %592 = vsyncpa [#allocation6], 1
    %593 = vsyncpa [#allocation7], 1
  %594 = vsyncmov [#allocation3]
  %s595 = vpop.sfrf %594
  %p596 = scmp.eq.s32.totalorder %s595, 0
  %p597 = pneg %p596
  %599 = shalt.err (%p597)
  %s600 = scalar_lea.sflag [#allocation3], 1
  %601 = vsyncmov %s600
  %s602 = vpop.sfrf %601
  %p603 = scmp.eq.s32.totalorder %s602, 0
  %p604 = pneg %p603
  %606 = shalt.err (%p604)

</llo_original>
